<compile_context>
chip_gen: v7x
topology: tpu7x:2x2x1
jax: 0.10.0
libtpu: 0.0.40
codegen_flags: <defaults>
</compile_context>

<pallas_src>
import functools

import numpy as np
import jax
import jax.numpy as jnp
from jax.experimental import pallas as pl
from jax.experimental.pallas import tpu as pltpu


def _kwds_conv_kernel(x_hbm, weff_ref, pb_ref, o_ref, xbuf, sem,
                      *, nI, TH, Hh, SH, SW, KS):
    """One grid step == one (sample, output-row-tile).

    x_hbm    : (B, Hp, Wp, Cp)      padded NHWC input, resident in HBM (pl.ANY)
    weff_ref : (KS*KS, Cp, Coutp)   per-sample folded depthwise*pointwise weights (VMEM)
    pb_ref   : (1, Coutp)           pointwise bias (f32)
    o_ref    : (TH, Wo, Coutp)      output row tile (lane-dense, Coutp % 128 == 0)
    xbuf     : (2, Hh, Wp, Cp)      double-buffered halo slab scratch (VMEM)
    sem      : DMA semaphores, shape (2,)
    """
    b = pl.program_id(0)
    i = pl.program_id(1)
    slot = i % 2

    def tile_copy(sample, tile, slot_):
        row0 = tile * (TH * SH)
        return pltpu.make_async_copy(
            x_hbm.at[sample, pl.ds(row0, Hh), :, :],
            xbuf.at[slot_],
            sem.at[slot_])

    # Prime the pipeline at the first row tile of every sample (safe under megacore
    # splitting of the batch axis: the chain is fully contained within one sample).
    @pl.when(i == 0)
    def _():
        tile_copy(b, 0, 0).start()

    # Prefetch the next row tile of this sample into the other slot.
    @pl.when(i + 1 < nI)
    def _():
        tile_copy(b, i + 1, 1 - slot).start()

    # Wait for the current tile's halo slab.
    tile_copy(b, i, slot).wait()

    _, Wo, Coutp = o_ref.shape
    Cp = weff_ref.shape[1]
    xs = xbuf.at[slot]                       # (Hh, Wp, Cp) VMEM view, zero-cost

    acc = jnp.zeros((TH * Wo, Coutp), jnp.float32)
    for ky in range(KS):
        for kx in range(KS):
            if SH == 1 and SW == 1:
                patch = xs[ky:ky + TH, kx:kx + Wo, :]               # (TH, Wo, Cp)
            else:
                # TODO(synk): for stride > 1 a wrapper-side space-to-depth would remove
                # these strided relayout slices entirely.
                big = xs[ky:ky + (TH - 1) * SH + 1,
                         kx:kx + (Wo - 1) * SW + 1, :]
                patch = big[::SH, ::SW, :]
            # Depthwise tap folded into the pointwise weight -> one MXU matmul per tap.
            acc = acc + jnp.dot(patch.reshape(TH * Wo, Cp),
                                weff_ref[ky * KS + kx],
                                preferred_element_type=jnp.float32)

    y = acc + pb_ref[...]
    o_ref[...] = y.reshape(TH, Wo, Coutp).astype(o_ref.dtype)


def kwds_conv2d(x, bank, attn_w, attn_b, pw_w, pw_b, *, kernel_size, stride=1,
                row_tile=8):
    """Pallas implementation of KWDSConv2D.forward.

    x      : (B, C, H, W)                    NCHW input
    bank   : (K, C, 1, KS, KS)               depthwise_kernel_bank
    attn_w : (K, C), attn_b : (K,)           attention_fc
    pw_w   : (Cout, C, 1, 1), pw_b : (Cout,) pointwise_conv
    returns (B, Cout, Ho, Wo) in NCHW, matching PyTorch.
    """
    B, C, H, W = x.shape
    Cout = pw_w.shape[0]
    KS = kernel_size
    SH, SW = (stride, stride) if isinstance(stride, int) else tuple(stride)
    pad = KS // 2
    Ho = (H + 2 * pad - KS) // SH + 1
    Wo = (W + 2 * pad - KS) // SW + 1

    # ---- lane padding: dense 128-lane loads/stores and 128-deep MXU contraction ----
    LANE = 128
    Cp = ((C + LANE - 1) // LANE) * LANE
    Coutp = ((Cout + LANE - 1) // LANE) * LANE

    # ---- output-row tiling ----
    TH = max(1, min(row_tile, Ho))
    nI = -(-Ho // TH)                       # ceil div
    Ho_pad = nI * TH
    Hh = (TH - 1) * SH + KS                 # halo slab height per row tile
    Hp_need = (Ho_pad - 1) * SH + KS        # padded input rows the tiling may touch
    Wp = W + 2 * pad
    Hp_have = H + 2 * pad
    extra_rows = max(0, Hp_need - Hp_have)  # extra zero rows so the last slab is in-bounds

    # ---- attention path, hoisted out of the conv kernel (tiny) ----
    xf = x.astype(jnp.float32)
    pooled = jnp.mean(xf, axis=(2, 3))                                           # (B, C)
    logits = pooled @ attn_w.astype(jnp.float32).T + attn_b.astype(jnp.float32)  # (B, K)
    attn = jax.nn.softmax(logits, axis=-1)                                       # (B, K)
    dynk = jnp.einsum('bk,kchw->bhwc', attn, bank[:, :, 0].astype(jnp.float32))  # (B,KS,KS,C)

    # ---- fold the dynamic depthwise kernel into the pointwise weight ----
    pw = pw_w[:, :, 0, 0].astype(jnp.float32)                                    # (Cout, C)
    w_eff = jnp.einsum('bhwc,oc->bhwco', dynk, pw).reshape(B, KS * KS, C, Cout)
    w_eff = jnp.pad(w_eff, ((0, 0), (0, 0), (0, Cp - C), (0, Coutp - Cout)))
    w_eff = w_eff.astype(x.dtype)                                                # (B,KS*KS,Cp,Coutp)
    pb = jnp.pad(pw_b.astype(jnp.float32), (0, Coutp - Cout)).reshape(1, Coutp)

    # ---- input: NHWC, spatial zero-pad, channel (lane) pad, bottom pad for tiling ----
    x_nhwc = jnp.transpose(x, (0, 2, 3, 1))                                      # (B, H, W, C)
    xp = jnp.pad(x_nhwc, ((0, 0), (pad, pad + extra_rows), (pad, pad), (0, Cp - C)))

    kernel = functools.partial(_kwds_conv_kernel,
                               nI=nI, TH=TH, Hh=Hh, SH=SH, SW=SW, KS=KS)

    out = pl.pallas_call(
        kernel,
        out_shape=jax.ShapeDtypeStruct((B, Ho_pad, Wo, Coutp), x.dtype),
        grid_spec=pltpu.PrefetchScalarGridSpec(
            num_scalar_prefetch=0,
            grid=(B, nI),
            in_specs=[
                pl.BlockSpec(memory_space=pl.ANY),                 # padded image stays in HBM
                pl.BlockSpec((None, KS * KS, Cp, Coutp), lambda b, i: (b, 0, 0, 0)),
                pl.BlockSpec((1, Coutp), lambda b, i: (0, 0)),
            ],
            out_specs=pl.BlockSpec((None, TH, Wo, Coutp), lambda b, i: (b, i, 0, 0)),
            scratch_shapes=[
                pltpu.VMEM((2, Hh, Wp, Cp), x.dtype),              # double-buffered halo slab
                pltpu.SemaphoreType.DMA((2,)),
            ],
        ),
        compiler_params=pltpu.CompilerParams(
            dimension_semantics=("parallel", "arbitrary"),
            vmem_limit_bytes=32 * 1024 * 1024,
        ),
    )(xp, w_eff, pb)

    out = out[:, :Ho, :, :Cout]                  # drop row-tile and lane padding
    return jnp.transpose(out, (0, 3, 1, 2))      # back to NCHW


def kwds_conv2d_reference(x, bank, attn_w, attn_b, pw_w, pw_b, *, kernel_size, stride=1):
    """Pure-JAX reference reproducing the PyTorch forward (per-sample dynamic kernel)."""
    B, C, H, W = x.shape
    KS = kernel_size
    pad = KS // 2
    pooled = jnp.mean(x, axis=(2, 3))                                        # (B, C)
    attn = jax.nn.softmax(pooled @ attn_w.T + attn_b, axis=1)                # (B, K)
    dynk = jnp.einsum('bk,kcij->bcij', attn, bank[:, :, 0])                  # (B, C, KS, KS)
    outs = []
    for b in range(B):
        dw = jax.lax.conv_general_dilated(
            x[b:b + 1], dynk[b][:, None],                                    # (C,1,KS,KS)
            window_strides=(stride, stride), padding=[(pad, pad), (pad, pad)],
            dimension_numbers=('NCHW', 'OIHW', 'NCHW'), feature_group_count=C)
        outs.append(dw)
    dw = jnp.concatenate(outs, axis=0)
    out = jnp.einsum('oc,bchw->bohw', pw_w[:, :, 0, 0], dw) + pw_b[None, :, None, None]
    return out


if __name__ == "__main__":
    # Small, PyTorch-module-consistent shapes (exercises batch, row tiling, lane padding).
    B, Cin, Cout, H, W = 2, 4, 8, 16, 16
    K, KS, STRIDE = 4, 3, 1

    key = jax.random.PRNGKey(0)
    kx_, kb, kaw, kab, kpw, kpb = jax.random.split(key, 6)

    x = jax.random.normal(kx_, (B, Cin, H, W), dtype=jnp.float32)
    bank = jax.random.normal(kb, (K, Cin, 1, KS, KS), dtype=jnp.float32)       # torch.randn init
    attn_w = jax.random.normal(kaw, (K, Cin), dtype=jnp.float32) * 0.1         # nn.Linear(Cin, K)
    attn_b = jax.random.normal(kab, (K,), dtype=jnp.float32) * 0.1
    pw_w = jax.random.normal(kpw, (Cout, Cin, 1, 1), dtype=jnp.float32) * 0.1  # Conv2d(Cin,Cout,1)
    pw_b = jax.random.normal(kpb, (Cout,), dtype=jnp.float32) * 0.1

    fwd = jax.jit(functools.partial(kwds_conv2d, kernel_size=KS, stride=STRIDE))
    out = jax.block_until_ready(fwd(x, bank, attn_w, attn_b, pw_w, pw_b))

    ref = kwds_conv2d_reference(x, bank, attn_w, attn_b, pw_w, pw_b,
                                kernel_size=KS, stride=STRIDE)
    np.testing.assert_allclose(np.asarray(out), np.asarray(ref), rtol=1e-4, atol=1e-4)

    print("KERNEL_OK")
</pallas_src>

<mosaic_0001>
module attributes {stable_mosaic.version = 11 : i64} {
  func.func @_kwds_conv_kernel(%arg0: i32, %arg1: i32, %arg2: memref<2x18x18x128xf32, #tpu.memory_space<any>>, %arg3: memref<1x9x128x128xf32, #tpu.memory_space<vmem>>, %arg4: memref<1x128xf32, #tpu.memory_space<vmem>>, %arg5: memref<1x8x16x128xf32, #tpu.memory_space<vmem>>, %arg6: memref<2x10x18x128xf32, #tpu.memory_space<vmem>>, %arg7: memref<2x!tpu.dma_semaphore, #tpu.memory_space<semaphore_mem>>) attributes {dimension_semantics = [#tpu.dimension_semantics<parallel>, #tpu.dimension_semantics<arbitrary>], iteration_bounds = array<i64: 2, 2>, scalar_prefetch = 0 : i64, scratch_operands = 2 : i64, tpu.core_type = #tpu.core_type<tc>, window_params = [{}, {transform_indices = @transform_1, window_bounds = array<i64: 1, 9, 128, 128>}, {pipeline_mode = #tpu.pipeline_mode<synchronous>, transform_indices = @transform_2, window_bounds = array<i64: 1, 128>}, {transform_indices = @transform_3, window_bounds = array<i64: 1, 8, 16, 128>}]} {
    %c2_i32 = arith.constant 2 : i32
    %c0_i32 = arith.constant 0 : i32
    %0 = arith.cmpi eq, %c2_i32, %c0_i32 : i32
    %c1_i32 = arith.constant 1 : i32
    %1 = arith.select %0, %c1_i32, %c2_i32 : i32
    %2 = arith.remsi %arg1, %1 : i32
    %c0_i32_0 = arith.constant 0 : i32
    %3 = arith.cmpi ne, %2, %c0_i32_0 : i32
    %c0_i32_1 = arith.constant 0 : i32
    %4 = arith.cmpi slt, %2, %c0_i32_1 : i32
    %c0_i32_2 = arith.constant 0 : i32
    %5 = arith.cmpi slt, %1, %c0_i32_2 : i32
    %6 = arith.xori %4, %5 : i1
    %7 = arith.andi %6, %3 : i1
    %8 = arith.addi %2, %1 : i32
    %9 = arith.select %7, %8, %2 : i32
    %c0_i32_3 = arith.constant 0 : i32
    %10 = arith.cmpi eq, %arg1, %c0_i32_3 : i32
    %11 = arith.extui %10 : i1 to i32
    %c0_i32_4 = arith.constant 0 : i32
    %12 = arith.cmpi ne, %11, %c0_i32_4 : i32
    scf.if %12 {
      %c0_i32_109 = arith.constant 0 : i32
      %c0_i32_110 = arith.constant 0 : i32
      %c0_i32_111 = arith.constant 0 : i32
      %c0_i32_112 = arith.constant 0 : i32
      %c0_i32_113 = arith.constant 0 : i32
      %104 = tpu.memref_slice %arg2[%arg0, %c0_i32_111, %c0_i32_112, %c0_i32_113] : memref<2x18x18x128xf32, #tpu.memory_space<any>> -> memref<1x10x18x128xf32, #tpu.memory_space<any>>
      %105 = tpu.memref_squeeze %104 : memref<1x10x18x128xf32, #tpu.memory_space<any>> -> memref<10x18x128xf32, #tpu.memory_space<any>>
      %c0_i32_114 = arith.constant 0 : i32
      %c0_i32_115 = arith.constant 0 : i32
      %c0_i32_116 = arith.constant 0 : i32
      %106 = tpu.memref_slice %arg6[%c0_i32_109, %c0_i32_114, %c0_i32_115, %c0_i32_116] : memref<2x10x18x128xf32, #tpu.memory_space<vmem>> -> memref<1x10x18x128xf32, #tpu.memory_space<vmem>>
      %107 = tpu.memref_squeeze %106 : memref<1x10x18x128xf32, #tpu.memory_space<vmem>> -> memref<10x18x128xf32, #tpu.memory_space<vmem>>
      %108 = tpu.memref_slice %arg7[%c0_i32_110] : memref<2x!tpu.dma_semaphore, #tpu.memory_space<semaphore_mem>> -> memref<1x!tpu.dma_semaphore, #tpu.memory_space<semaphore_mem>>
      %109 = tpu.memref_squeeze %108 : memref<1x!tpu.dma_semaphore, #tpu.memory_space<semaphore_mem>> -> memref<!tpu.dma_semaphore, #tpu.memory_space<semaphore_mem>>
      tpu.enqueue_dma source(%105 : memref<10x18x128xf32, #tpu.memory_space<any>>) target(%107 : memref<10x18x128xf32, #tpu.memory_space<vmem>>) target_semaphore(%109 : memref<!tpu.dma_semaphore, #tpu.memory_space<semaphore_mem>>)
    } else {
    }
    %c1_i32_5 = arith.constant 1 : i32
    %13 = arith.addi %arg1, %c1_i32_5 : i32
    %c2_i32_6 = arith.constant 2 : i32
    %14 = arith.cmpi slt, %13, %c2_i32_6 : i32
    %15 = arith.extui %14 : i1 to i32
    %c0_i32_7 = arith.constant 0 : i32
    %16 = arith.cmpi ne, %15, %c0_i32_7 : i32
    scf.if %16 {
      %c1_i32_109 = arith.constant 1 : i32
      %104 = arith.addi %arg1, %c1_i32_109 : i32
      %c1_i32_110 = arith.constant 1 : i32
      %105 = arith.subi %c1_i32_110, %9 : i32
      %c8_i32_111 = arith.constant 8 : i32
      %106 = arith.muli %104, %c8_i32_111 : i32
      %c0_i32_112 = arith.constant 0 : i32
      %c0_i32_113 = arith.constant 0 : i32
      %107 = tpu.memref_slice %arg2[%arg0, %106, %c0_i32_112, %c0_i32_113] : memref<2x18x18x128xf32, #tpu.memory_space<any>> -> memref<1x10x18x128xf32, #tpu.memory_space<any>>
      %108 = tpu.memref_squeeze %107 : memref<1x10x18x128xf32, #tpu.memory_space<any>> -> memref<10x18x128xf32, #tpu.memory_space<any>>
      %c0_i32_114 = arith.constant 0 : i32
      %c0_i32_115 = arith.constant 0 : i32
      %c0_i32_116 = arith.constant 0 : i32
      %109 = tpu.memref_slice %arg6[%105, %c0_i32_114, %c0_i32_115, %c0_i32_116] : memref<2x10x18x128xf32, #tpu.memory_space<vmem>> -> memref<1x10x18x128xf32, #tpu.memory_space<vmem>>
      %110 = tpu.memref_squeeze %109 : memref<1x10x18x128xf32, #tpu.memory_space<vmem>> -> memref<10x18x128xf32, #tpu.memory_space<vmem>>
      %111 = tpu.memref_slice %arg7[%105] : memref<2x!tpu.dma_semaphore, #tpu.memory_space<semaphore_mem>> -> memref<1x!tpu.dma_semaphore, #tpu.memory_space<semaphore_mem>>
      %112 = tpu.memref_squeeze %111 : memref<1x!tpu.dma_semaphore, #tpu.memory_space<semaphore_mem>> -> memref<!tpu.dma_semaphore, #tpu.memory_space<semaphore_mem>>
      tpu.enqueue_dma source(%108 : memref<10x18x128xf32, #tpu.memory_space<any>>) target(%110 : memref<10x18x128xf32, #tpu.memory_space<vmem>>) target_semaphore(%112 : memref<!tpu.dma_semaphore, #tpu.memory_space<semaphore_mem>>)
    } else {
    }
    %c8_i32 = arith.constant 8 : i32
    %17 = arith.muli %arg1, %c8_i32 : i32
    %c0_i32_8 = arith.constant 0 : i32
    %c0_i32_9 = arith.constant 0 : i32
    %18 = tpu.memref_slice %arg2[%arg0, %17, %c0_i32_8, %c0_i32_9] : memref<2x18x18x128xf32, #tpu.memory_space<any>> -> memref<1x10x18x128xf32, #tpu.memory_space<any>>
    %19 = tpu.memref_squeeze %18 : memref<1x10x18x128xf32, #tpu.memory_space<any>> -> memref<10x18x128xf32, #tpu.memory_space<any>>
    %c0_i32_10 = arith.constant 0 : i32
    %c0_i32_11 = arith.constant 0 : i32
    %c0_i32_12 = arith.constant 0 : i32
    %20 = tpu.memref_slice %arg6[%9, %c0_i32_10, %c0_i32_11, %c0_i32_12] : memref<2x10x18x128xf32, #tpu.memory_space<vmem>> -> memref<1x10x18x128xf32, #tpu.memory_space<vmem>>
    %21 = tpu.memref_squeeze %20 : memref<1x10x18x128xf32, #tpu.memory_space<vmem>> -> memref<10x18x128xf32, #tpu.memory_space<vmem>>
    %22 = tpu.memref_slice %arg7[%9] : memref<2x!tpu.dma_semaphore, #tpu.memory_space<semaphore_mem>> -> memref<1x!tpu.dma_semaphore, #tpu.memory_space<semaphore_mem>>
    %23 = tpu.memref_squeeze %22 : memref<1x!tpu.dma_semaphore, #tpu.memory_space<semaphore_mem>> -> memref<!tpu.dma_semaphore, #tpu.memory_space<semaphore_mem>>
    tpu.wait_dma2 semaphore(%23 : memref<!tpu.dma_semaphore, #tpu.memory_space<semaphore_mem>>) src(%19 : memref<10x18x128xf32, #tpu.memory_space<any>>) dst(%21 : memref<10x18x128xf32, #tpu.memory_space<vmem>>)
    %cst = arith.constant 0.000000e+00 : f32
    %24 = vector.broadcast %cst : f32 to vector<128x128xf32>
    %c0_i32_13 = arith.constant 0 : i32
    %c0_i32_14 = arith.constant 0 : i32
    %c0_i32_15 = arith.constant 0 : i32
    %25 = tpu.memref_slice %arg6[%9, %c0_i32_13, %c0_i32_14, %c0_i32_15] : memref<2x10x18x128xf32, #tpu.memory_space<vmem>> -> memref<1x10x18x128xf32, #tpu.memory_space<vmem>>
    %26 = tpu.memref_squeeze %25 : memref<1x10x18x128xf32, #tpu.memory_space<vmem>> -> memref<10x18x128xf32, #tpu.memory_space<vmem>>
    %c0 = arith.constant 0 : index
    %c0_16 = arith.constant 0 : index
    %c0_17 = arith.constant 0 : index
    %27 = vector.load %26[%c0, %c0_16, %c0_17] : memref<10x18x128xf32, #tpu.memory_space<vmem>>, vector<8x16x128xf32>
    %28 = vector.shape_cast %27 : vector<8x16x128xf32> to vector<128x128xf32>
    %c0_18 = arith.constant 0 : index
    %c0_19 = arith.constant 0 : index
    %c0_20 = arith.constant 0 : index
    %c0_21 = arith.constant 0 : index
    %29 = vector.load %arg3[%c0_18, %c0_19, %c0_20, %c0_21] : memref<1x9x128x128xf32, #tpu.memory_space<vmem>>, vector<1x1x128x128xf32>
    %30 = vector.shape_cast %29 : vector<1x1x128x128xf32> to vector<128x128xf32>
    %cst_22 = arith.constant dense<0.000000e+00> : vector<128x128xf32>
    %31 = tpu.matmul %28, %30, %cst_22 {dimension_numbers = #tpu.dot_dimension_numbers<[1], [0], [0], [1], [0, 0, 1, 1], [], []>} : vector<128x128xf32>, vector<128x128xf32>, vector<128x128xf32> -> vector<128x128xf32>
    %32 = arith.addf %24, %31 : vector<128x128xf32>
    %c0_i32_23 = arith.constant 0 : i32
    %c0_i32_24 = arith.constant 0 : i32
    %c0_i32_25 = arith.constant 0 : i32
    %33 = tpu.memref_slice %arg6[%9, %c0_i32_23, %c0_i32_24, %c0_i32_25] : memref<2x10x18x128xf32, #tpu.memory_space<vmem>> -> memref<1x10x18x128xf32, #tpu.memory_space<vmem>>
    %34 = tpu.memref_squeeze %33 : memref<1x10x18x128xf32, #tpu.memory_space<vmem>> -> memref<10x18x128xf32, #tpu.memory_space<vmem>>
    %c0_26 = arith.constant 0 : index
    %c1 = arith.constant 1 : index
    %c0_27 = arith.constant 0 : index
    %35 = vector.load %34[%c0_26, %c1, %c0_27] : memref<10x18x128xf32, #tpu.memory_space<vmem>>, vector<8x16x128xf32>
    %36 = vector.shape_cast %35 : vector<8x16x128xf32> to vector<128x128xf32>
    %c0_28 = arith.constant 0 : index
    %c1_29 = arith.constant 1 : index
    %c0_30 = arith.constant 0 : index
    %c0_31 = arith.constant 0 : index
    %37 = vector.load %arg3[%c0_28, %c1_29, %c0_30, %c0_31] : memref<1x9x128x128xf32, #tpu.memory_space<vmem>>, vector<1x1x128x128xf32>
    %38 = vector.shape_cast %37 : vector<1x1x128x128xf32> to vector<128x128xf32>
    %cst_32 = arith.constant dense<0.000000e+00> : vector<128x128xf32>
    %39 = tpu.matmul %36, %38, %cst_32 {dimension_numbers = #tpu.dot_dimension_numbers<[1], [0], [0], [1], [0, 0, 1, 1], [], []>} : vector<128x128xf32>, vector<128x128xf32>, vector<128x128xf32> -> vector<128x128xf32>
    %40 = arith.addf %32, %39 : vector<128x128xf32>
    %c0_i32_33 = arith.constant 0 : i32
    %c0_i32_34 = arith.constant 0 : i32
    %c0_i32_35 = arith.constant 0 : i32
    %41 = tpu.memref_slice %arg6[%9, %c0_i32_33, %c0_i32_34, %c0_i32_35] : memref<2x10x18x128xf32, #tpu.memory_space<vmem>> -> memref<1x10x18x128xf32, #tpu.memory_space<vmem>>
    %42 = tpu.memref_squeeze %41 : memref<1x10x18x128xf32, #tpu.memory_space<vmem>> -> memref<10x18x128xf32, #tpu.memory_space<vmem>>
    %c0_36 = arith.constant 0 : index
    %c2 = arith.constant 2 : index
    %c0_37 = arith.constant 0 : index
    %43 = vector.load %42[%c0_36, %c2, %c0_37] : memref<10x18x128xf32, #tpu.memory_space<vmem>>, vector<8x16x128xf32>
    %44 = vector.shape_cast %43 : vector<8x16x128xf32> to vector<128x128xf32>
    %c0_38 = arith.constant 0 : index
    %c2_39 = arith.constant 2 : index
    %c0_40 = arith.constant 0 : index
    %c0_41 = arith.constant 0 : index
    %45 = vector.load %arg3[%c0_38, %c2_39, %c0_40, %c0_41] : memref<1x9x128x128xf32, #tpu.memory_space<vmem>>, vector<1x1x128x128xf32>
    %46 = vector.shape_cast %45 : vector<1x1x128x128xf32> to vector<128x128xf32>
    %cst_42 = arith.constant dense<0.000000e+00> : vector<128x128xf32>
    %47 = tpu.matmul %44, %46, %cst_42 {dimension_numbers = #tpu.dot_dimension_numbers<[1], [0], [0], [1], [0, 0, 1, 1], [], []>} : vector<128x128xf32>, vector<128x128xf32>, vector<128x128xf32> -> vector<128x128xf32>
    %48 = arith.addf %40, %47 : vector<128x128xf32>
    %c0_i32_43 = arith.constant 0 : i32
    %c0_i32_44 = arith.constant 0 : i32
    %c0_i32_45 = arith.constant 0 : i32
    %49 = tpu.memref_slice %arg6[%9, %c0_i32_43, %c0_i32_44, %c0_i32_45] : memref<2x10x18x128xf32, #tpu.memory_space<vmem>> -> memref<1x10x18x128xf32, #tpu.memory_space<vmem>>
    %50 = tpu.memref_squeeze %49 : memref<1x10x18x128xf32, #tpu.memory_space<vmem>> -> memref<10x18x128xf32, #tpu.memory_space<vmem>>
    %c1_46 = arith.constant 1 : index
    %c0_47 = arith.constant 0 : index
    %c0_48 = arith.constant 0 : index
    %51 = vector.load %50[%c1_46, %c0_47, %c0_48] : memref<10x18x128xf32, #tpu.memory_space<vmem>>, vector<8x16x128xf32>
    %52 = vector.shape_cast %51 : vector<8x16x128xf32> to vector<128x128xf32>
    %c0_49 = arith.constant 0 : index
    %c3 = arith.constant 3 : index
    %c0_50 = arith.constant 0 : index
    %c0_51 = arith.constant 0 : index
    %53 = vector.load %arg3[%c0_49, %c3, %c0_50, %c0_51] : memref<1x9x128x128xf32, #tpu.memory_space<vmem>>, vector<1x1x128x128xf32>
    %54 = vector.shape_cast %53 : vector<1x1x128x128xf32> to vector<128x128xf32>
    %cst_52 = arith.constant dense<0.000000e+00> : vector<128x128xf32>
    %55 = tpu.matmul %52, %54, %cst_52 {dimension_numbers = #tpu.dot_dimension_numbers<[1], [0], [0], [1], [0, 0, 1, 1], [], []>} : vector<128x128xf32>, vector<128x128xf32>, vector<128x128xf32> -> vector<128x128xf32>
    %56 = arith.addf %48, %55 : vector<128x128xf32>
    %c0_i32_53 = arith.constant 0 : i32
    %c0_i32_54 = arith.constant 0 : i32
    %c0_i32_55 = arith.constant 0 : i32
    %57 = tpu.memref_slice %arg6[%9, %c0_i32_53, %c0_i32_54, %c0_i32_55] : memref<2x10x18x128xf32, #tpu.memory_space<vmem>> -> memref<1x10x18x128xf32, #tpu.memory_space<vmem>>
    %58 = tpu.memref_squeeze %57 : memref<1x10x18x128xf32, #tpu.memory_space<vmem>> -> memref<10x18x128xf32, #tpu.memory_space<vmem>>
    %c1_56 = arith.constant 1 : index
    %c1_57 = arith.constant 1 : index
    %c0_58 = arith.constant 0 : index
    %59 = vector.load %58[%c1_56, %c1_57, %c0_58] : memref<10x18x128xf32, #tpu.memory_space<vmem>>, vector<8x16x128xf32>
    %60 = vector.shape_cast %59 : vector<8x16x128xf32> to vector<128x128xf32>
    %c0_59 = arith.constant 0 : index
    %c4 = arith.constant 4 : index
    %c0_60 = arith.constant 0 : index
    %c0_61 = arith.constant 0 : index
    %61 = vector.load %arg3[%c0_59, %c4, %c0_60, %c0_61] : memref<1x9x128x128xf32, #tpu.memory_space<vmem>>, vector<1x1x128x128xf32>
    %62 = vector.shape_cast %61 : vector<1x1x128x128xf32> to vector<128x128xf32>
    %cst_62 = arith.constant dense<0.000000e+00> : vector<128x128xf32>
    %63 = tpu.matmul %60, %62, %cst_62 {dimension_numbers = #tpu.dot_dimension_numbers<[1], [0], [0], [1], [0, 0, 1, 1], [], []>} : vector<128x128xf32>, vector<128x128xf32>, vector<128x128xf32> -> vector<128x128xf32>
    %64 = arith.addf %56, %63 : vector<128x128xf32>
    %c0_i32_63 = arith.constant 0 : i32
    %c0_i32_64 = arith.constant 0 : i32
    %c0_i32_65 = arith.constant 0 : i32
    %65 = tpu.memref_slice %arg6[%9, %c0_i32_63, %c0_i32_64, %c0_i32_65] : memref<2x10x18x128xf32, #tpu.memory_space<vmem>> -> memref<1x10x18x128xf32, #tpu.memory_space<vmem>>
    %66 = tpu.memref_squeeze %65 : memref<1x10x18x128xf32, #tpu.memory_space<vmem>> -> memref<10x18x128xf32, #tpu.memory_space<vmem>>
    %c1_66 = arith.constant 1 : index
    %c2_67 = arith.constant 2 : index
    %c0_68 = arith.constant 0 : index
    %67 = vector.load %66[%c1_66, %c2_67, %c0_68] : memref<10x18x128xf32, #tpu.memory_space<vmem>>, vector<8x16x128xf32>
    %68 = vector.shape_cast %67 : vector<8x16x128xf32> to vector<128x128xf32>
    %c0_69 = arith.constant 0 : index
    %c5 = arith.constant 5 : index
    %c0_70 = arith.constant 0 : index
    %c0_71 = arith.constant 0 : index
    %69 = vector.load %arg3[%c0_69, %c5, %c0_70, %c0_71] : memref<1x9x128x128xf32, #tpu.memory_space<vmem>>, vector<1x1x128x128xf32>
    %70 = vector.shape_cast %69 : vector<1x1x128x128xf32> to vector<128x128xf32>
    %cst_72 = arith.constant dense<0.000000e+00> : vector<128x128xf32>
    %71 = tpu.matmul %68, %70, %cst_72 {dimension_numbers = #tpu.dot_dimension_numbers<[1], [0], [0], [1], [0, 0, 1, 1], [], []>} : vector<128x128xf32>, vector<128x128xf32>, vector<128x128xf32> -> vector<128x128xf32>
    %72 = arith.addf %64, %71 : vector<128x128xf32>
    %c0_i32_73 = arith.constant 0 : i32
    %c0_i32_74 = arith.constant 0 : i32
    %c0_i32_75 = arith.constant 0 : i32
    %73 = tpu.memref_slice %arg6[%9, %c0_i32_73, %c0_i32_74, %c0_i32_75] : memref<2x10x18x128xf32, #tpu.memory_space<vmem>> -> memref<1x10x18x128xf32, #tpu.memory_space<vmem>>
    %74 = tpu.memref_squeeze %73 : memref<1x10x18x128xf32, #tpu.memory_space<vmem>> -> memref<10x18x128xf32, #tpu.memory_space<vmem>>
    %c2_76 = arith.constant 2 : index
    %c0_77 = arith.constant 0 : index
    %c0_78 = arith.constant 0 : index
    %75 = vector.load %74[%c2_76, %c0_77, %c0_78] : memref<10x18x128xf32, #tpu.memory_space<vmem>>, vector<8x16x128xf32>
    %76 = vector.shape_cast %75 : vector<8x16x128xf32> to vector<128x128xf32>
    %c0_79 = arith.constant 0 : index
    %c6 = arith.constant 6 : index
    %c0_80 = arith.constant 0 : index
    %c0_81 = arith.constant 0 : index
    %77 = vector.load %arg3[%c0_79, %c6, %c0_80, %c0_81] : memref<1x9x128x128xf32, #tpu.memory_space<vmem>>, vector<1x1x128x128xf32>
    %78 = vector.shape_cast %77 : vector<1x1x128x128xf32> to vector<128x128xf32>
    %cst_82 = arith.constant dense<0.000000e+00> : vector<128x128xf32>
    %79 = tpu.matmul %76, %78, %cst_82 {dimension_numbers = #tpu.dot_dimension_numbers<[1], [0], [0], [1], [0, 0, 1, 1], [], []>} : vector<128x128xf32>, vector<128x128xf32>, vector<128x128xf32> -> vector<128x128xf32>
    %80 = arith.addf %72, %79 : vector<128x128xf32>
    %c0_i32_83 = arith.constant 0 : i32
    %c0_i32_84 = arith.constant 0 : i32
    %c0_i32_85 = arith.constant 0 : i32
    %81 = tpu.memref_slice %arg6[%9, %c0_i32_83, %c0_i32_84, %c0_i32_85] : memref<2x10x18x128xf32, #tpu.memory_space<vmem>> -> memref<1x10x18x128xf32, #tpu.memory_space<vmem>>
    %82 = tpu.memref_squeeze %81 : memref<1x10x18x128xf32, #tpu.memory_space<vmem>> -> memref<10x18x128xf32, #tpu.memory_space<vmem>>
    %c2_86 = arith.constant 2 : index
    %c1_87 = arith.constant 1 : index
    %c0_88 = arith.constant 0 : index
    %83 = vector.load %82[%c2_86, %c1_87, %c0_88] : memref<10x18x128xf32, #tpu.memory_space<vmem>>, vector<8x16x128xf32>
    %84 = vector.shape_cast %83 : vector<8x16x128xf32> to vector<128x128xf32>
    %c0_89 = arith.constant 0 : index
    %c7 = arith.constant 7 : index
    %c0_90 = arith.constant 0 : index
    %c0_91 = arith.constant 0 : index
    %85 = vector.load %arg3[%c0_89, %c7, %c0_90, %c0_91] : memref<1x9x128x128xf32, #tpu.memory_space<vmem>>, vector<1x1x128x128xf32>
    %86 = vector.shape_cast %85 : vector<1x1x128x128xf32> to vector<128x128xf32>
    %cst_92 = arith.constant dense<0.000000e+00> : vector<128x128xf32>
    %87 = tpu.matmul %84, %86, %cst_92 {dimension_numbers = #tpu.dot_dimension_numbers<[1], [0], [0], [1], [0, 0, 1, 1], [], []>} : vector<128x128xf32>, vector<128x128xf32>, vector<128x128xf32> -> vector<128x128xf32>
    %88 = arith.addf %80, %87 : vector<128x128xf32>
    %c0_i32_93 = arith.constant 0 : i32
    %c0_i32_94 = arith.constant 0 : i32
    %c0_i32_95 = arith.constant 0 : i32
    %89 = tpu.memref_slice %arg6[%9, %c0_i32_93, %c0_i32_94, %c0_i32_95] : memref<2x10x18x128xf32, #tpu.memory_space<vmem>> -> memref<1x10x18x128xf32, #tpu.memory_space<vmem>>
    %90 = tpu.memref_squeeze %89 : memref<1x10x18x128xf32, #tpu.memory_space<vmem>> -> memref<10x18x128xf32, #tpu.memory_space<vmem>>
    %c2_96 = arith.constant 2 : index
    %c2_97 = arith.constant 2 : index
    %c0_98 = arith.constant 0 : index
    %91 = vector.load %90[%c2_96, %c2_97, %c0_98] : memref<10x18x128xf32, #tpu.memory_space<vmem>>, vector<8x16x128xf32>
    %92 = vector.shape_cast %91 : vector<8x16x128xf32> to vector<128x128xf32>
    %c0_99 = arith.constant 0 : index
    %c8 = arith.constant 8 : index
    %c0_100 = arith.constant 0 : index
    %c0_101 = arith.constant 0 : index
    %93 = vector.load %arg3[%c0_99, %c8, %c0_100, %c0_101] : memref<1x9x128x128xf32, #tpu.memory_space<vmem>>, vector<1x1x128x128xf32>
    %94 = vector.shape_cast %93 : vector<1x1x128x128xf32> to vector<128x128xf32>
    %cst_102 = arith.constant dense<0.000000e+00> : vector<128x128xf32>
    %95 = tpu.matmul %92, %94, %cst_102 {dimension_numbers = #tpu.dot_dimension_numbers<[1], [0], [0], [1], [0, 0, 1, 1], [], []>} : vector<128x128xf32>, vector<128x128xf32>, vector<128x128xf32> -> vector<128x128xf32>
    %96 = arith.addf %88, %95 : vector<128x128xf32>
    %c0_103 = arith.constant 0 : index
    %c0_104 = arith.constant 0 : index
    %97 = vector.load %arg4[%c0_103, %c0_104] : memref<1x128xf32, #tpu.memory_space<vmem>>, vector<1x128xf32>
    %98 = vector.broadcast %97 : vector<1x128xf32> to vector<128x128xf32>
    %99 = arith.addf %96, %98 : vector<128x128xf32>
    %100 = vector.shape_cast %99 : vector<128x128xf32> to vector<8x16x128xf32>
    %c0_105 = arith.constant 0 : index
    %c0_106 = arith.constant 0 : index
    %c0_107 = arith.constant 0 : index
    %c0_108 = arith.constant 0 : index
    %101 = vector.load %arg5[%c0_105, %c0_106, %c0_107, %c0_108] : memref<1x8x16x128xf32, #tpu.memory_space<vmem>>, vector<1x8x16x128xf32>
    %102 = vector.shape_cast %101 : vector<1x8x16x128xf32> to vector<8x16x128xf32>
    %103 = vector.shape_cast %100 : vector<8x16x128xf32> to vector<1x8x16x128xf32>
    tpu.vector_store %arg5[%c0_105, %c0_106, %c0_107, %c0_108], %103 {strides = array<i32>} : memref<1x8x16x128xf32, #tpu.memory_space<vmem>>, vector<1x8x16x128xf32>,
    return
  }
  func.func @transform_1(%arg0: i32, %arg1: i32) -> (i32, i32, i32, i32) {
    %c0_i32 = arith.constant 0 : i32
    %c0_i32_0 = arith.constant 0 : i32
    %c0_i32_1 = arith.constant 0 : i32
    %c0_i32_2 = arith.constant 0 : i32
    return %arg0, %c0_i32, %c0_i32_0, %c0_i32_1 : i32, i32, i32, i32
  }
  func.func @transform_2(%arg0: i32, %arg1: i32) -> (i32, i32) {
    %c0_i32 = arith.constant 0 : i32
    %c0_i32_0 = arith.constant 0 : i32
    %c0_i32_1 = arith.constant 0 : i32
    return %c0_i32, %c0_i32_0 : i32, i32
  }
  func.func @transform_3(%arg0: i32, %arg1: i32) -> (i32, i32, i32, i32) {
    %c0_i32 = arith.constant 0 : i32
    %c0_i32_0 = arith.constant 0 : i32
    %c0_i32_1 = arith.constant 0 : i32
    return %arg0, %arg1, %c0_i32, %c0_i32_0 : i32, i32, i32, i32
  }
}

</mosaic_0001>

<llo_original>
// kernel: kwds_conv2d.1
$region0: #{kwds_conv2d.1}
  #allocation0 [shape = 'u32[]', space=smem, size = 0x4, offset = 0x4, fixed_abs, tag = 'smem constant byte address 0x4 - core index']
  #allocation1 [shape = 'u32[144,128]{1,0:T(1,128)}', space=vmem, size = 0x12000, scoped, tag = 'internal scratch']
  #allocation2 [shape = 'f32[2,10,18,128]{3,2,1,0:T(8,128)}', space=vmem, size = 0x3c000, scoped, tag = 'scratch operand']
  #allocation3 [shape = 's32[2]{0}', space=sflag, size = 0x8, scoped, tag = 'scratch operand']
  #allocation4 [shape = 's32[]', space=sflag, size = 0x4, offset = 0, fixed_abs, tag = 'sflag constant byte address 0x0 - dummy sync flag']
  #allocation5 [shape = 's32[]', space=sflag, size = 0x4, offset = 0, fixed_abs, tag = 'sflag constant byte address 0x0 - dummy sync flag']
  %s0 = inlined_call_operand.vmem [shape: f32[2,18,18,128], index: 0, kind: input, shape index: {}]
  %s1 = inlined_call_operand.vmem [shape: f32[2,9,128,128], index: 1, kind: input, shape index: {}]
  %s2 = inlined_call_operand.vmem [shape: f32[1,128], index: 2, kind: input, shape index: {}]
  %s3 = inlined_call_operand.vmem [shape: f32[2,16,16,128], index: 3, kind: output, shape index: {}]
  %s4 = sld [smem:[#allocation0]]
  $region123: #{kwds_conv2d.1} parent=0
    _
  %s6 = ssub.s32 1, %s4
  %s7 = scalar_select 0, %s6, %s4
  loop: start=0, step=1, limit=6
  $region2: #{kwds_conv2d.1} parent=0 // loop_pre_header
    _
  $region3: #{kwds_conv2d.1} parent=0 // loop_header
    %s9 = sphi 0, %s13
    %p10 = scmp.ge.s32.totalorder %s9, 6
    %s16 = sphi 0, %s28
    %s17 = sphi 0, %s24
    %s18 = sphi 0, %s16
    %s19 = sphi 0, %s17
    %s20 = sphi 0, %s18
    %s21 = sphi 0, %s19
    %s31 = sphi 0, %s33
    %s34 = sphi 0, %s31
    %s35 = sphi 0, %s34
    %s51 = sphi 0, %s35
    %s55 = sphi 0, %s55
    %s57 = sphi 0, %s55
    %s58 = sphi 0, %s57
    %s72 = sphi 0, %s58
    %s80 = sphi 0, %s82
    %s83 = sphi 0, %s80
    %s84 = sphi 0, %s83
    %s100 = sphi 0, %s84
  $region4: #{kwds_conv2d.1} parent=0 // loop_header_branch
    %12 = sbr.rel (%p10) target = $region8
  $region5: #{kwds_conv2d.1} parent=0 // loop_body
    %s14 = ssub.s32 %s9, 1
    %s15 = ssub.s32 %s9, 2
    %s22 = sadd.s32 1, %s17
    %p23 = scmp.ge.s32.totalorder %s22, 2
    %s24 = scalar_select %p23, 0, %s22
    %s25 = sadd.s32 1, %s16
    %s26 = scalar_select %p23, %s25, %s16
    %p27 = scmp.ge.s32.totalorder %s26, 2
    %s28 = scalar_select %p27, 0, %s26
    %s29 = ssub.s32 %s16, %s28
    %p30 = scmp.eq.s32.totalorder %s29, 0
    %s32 = sadd.s32 %s31, 1
    %s33 = scalar_select %p30, %s31, %s32
    %p36 = pneg %p30
    %p37 = scmp.eq.s32.totalorder %s9, 3
    %p38 = por %p36, %p37
    %p39 = scmp.ne.s32.totalorder %s31, %s34
    %p40 = scmp.eq.s32.totalorder %s9, 0
    %p41 = por %p39, %p40
    %p42 = scmp.ne.s32.totalorder %s31, %s34
    %p43 = scmp.eq.s32.totalorder %s14, 3
    %p44 = por %p42, %p43
    %p45 = scmp.ne.s32.totalorder %s34, %s35
    %p46 = scmp.eq.s32.totalorder %s14, 0
    %p47 = por %p45, %p46
    %p48 = scmp.ne.s32.totalorder %s34, %s35
    %p49 = scmp.eq.s32.totalorder %s15, 3
    %p50 = por %p48, %p49
    %p52 = scmp.ne.s32.totalorder %s35, %s51
    %p53 = scmp.eq.s32.totalorder %s15, 0
    %p54 = por %p52, %p53
    %s56 = sadd.s32 %s55, 1
    %p59 = scmp.eq.s32.totalorder %s9, 3
    %p60 = scmp.ne.s32.totalorder %s55, %s57
    %p61 = scmp.eq.s32.totalorder %s9, 0
    %p62 = por %p60, %p61
    %p63 = scmp.ne.s32.totalorder %s55, %s57
    %p64 = scmp.eq.s32.totalorder %s14, 3
    %p65 = por %p63, %p64
    %p66 = scmp.ne.s32.totalorder %s57, %s58
    %p67 = scmp.eq.s32.totalorder %s14, 0
    %p68 = por %p66, %p67
    %p69 = scmp.ne.s32.totalorder %s57, %s58
    %p70 = scmp.eq.s32.totalorder %s15, 3
    %p71 = por %p69, %p70
    %p73 = scmp.ne.s32.totalorder %s58, %s72
    %p74 = scmp.eq.s32.totalorder %s15, 0
    %p75 = por %p73, %p74
    %s76 = ssub.s32 %s16, %s28
    %s77 = ssub.s32 %s17, %s24
    %s78 = sor.u32 %s76, %s77
    %p79 = scmp.eq.s32.totalorder %s78, 0
    %s81 = sadd.s32 %s80, 1
    %s82 = scalar_select %p79, %s80, %s81
    %p85 = pneg %p79
    %p86 = scmp.eq.s32.totalorder %s9, 3
    %p87 = por %p85, %p86
    %p88 = scmp.ne.s32.totalorder %s80, %s83
    %p89 = scmp.eq.s32.totalorder %s9, 0
    %p90 = por %p88, %p89
    %p91 = scmp.ne.s32.totalorder %s80, %s83
    %p92 = scmp.eq.s32.totalorder %s14, 3
    %p93 = por %p91, %p92
    %p94 = scmp.ne.s32.totalorder %s83, %s84
    %p95 = scmp.eq.s32.totalorder %s14, 0
    %p96 = por %p94, %p95
    %p97 = scmp.ne.s32.totalorder %s83, %s84
    %p98 = scmp.eq.s32.totalorder %s15, 3
    %p99 = por %p97, %p98
    %p101 = scmp.ne.s32.totalorder %s84, %s100
    %p102 = scmp.eq.s32.totalorder %s15, 0
    %p103 = por %p101, %p102
    %p104 = scmp.le.s32.totalorder 1, %s9
    %p105 = scmp.lt.s32.totalorder %s9, 5
    %p106 = pnand %p104, %p105
    %p107 = pneg %p106
    // Predicated region
    $region9: #{kwds_conv2d.1} parent=5 // pred_check
      _
    $region10: #{kwds_conv2d.1} parent=5 // pred_check_branch
      %109 = sbr.rel (%p106) target = $region12
    $region11: #{kwds_conv2d.1} parent=5 // pred_region
      %s110 = ssub.s32 %s9, 1
      // Predicated region
      $region13: #{kwds_conv2d.1} parent=11 // pred_check
        %p111 = pneg %p68
      $region14: #{kwds_conv2d.1} parent=11 // pred_check_branch
        %113 = sbr.rel (%p111) target = $region16
      $region15: #{kwds_conv2d.1} parent=11 // pred_region
        _
      $region16: #{kwds_conv2d.1} parent=11 // pred_fallthru
        _
    $region12: #{kwds_conv2d.1} parent=5 // pred_fallthru
      _
    %p114 = scmp.lt.s32.totalorder %s9, 4
    // Predicated region
    $region17: #{kwds_conv2d.1} parent=5 // pred_check
      %p115 = pneg %p114
    $region18: #{kwds_conv2d.1} parent=5 // pred_check_branch
      %117 = sbr.rel (%p115) target = $region20
    $region19: #{kwds_conv2d.1} parent=5 // pred_region
      // Predicated region
      $region21: #{kwds_conv2d.1} parent=19 // pred_check
        %p118 = pneg %p41
      $region22: #{kwds_conv2d.1} parent=19 // pred_check_branch
        %120 = sbr.rel (%p118) target = $region24
      $region23: #{kwds_conv2d.1} parent=19 // pred_region
        %p121 = scmp.lt.s32.totalorder %s16, 1
        %s122 = scalar_select %p121, %s16, 1
        %s123 = smul.addr %s122, 144
        %s124 = smul.addr %s123, 8
        %s125 = scalar_lea.vmem %s1, %s124
      $region24: #{kwds_conv2d.1} parent=19 // pred_fallthru
        _
    $region20: #{kwds_conv2d.1} parent=5 // pred_fallthru
      _
    %p126 = scmp.le.s32.totalorder 1, %s9
    %p127 = scmp.lt.s32.totalorder %s9, 5
    %p128 = pnand %p126, %p127
    %p129 = pneg %p128
    // Predicated region
    $region25: #{kwds_conv2d.1} parent=5 // pred_check
      _
    $region26: #{kwds_conv2d.1} parent=5 // pred_check_branch
      %131 = sbr.rel (%p128) target = $region28
    $region27: #{kwds_conv2d.1} parent=5 // pred_region
      %s132 = ssub.s32 %s9, 1
      %p133 = scmp.lt.s32.totalorder %s18, 1
      %s134 = scalar_select %p133, %s18, 1
      %s135 = smul.addr %s134, 144
      %s136 = smul.addr %s135, 8
      %s137 = scalar_lea.vmem %s1, %s136
      %p138 = pneg %p47
      %p139 = pneg %p44
      %p140 = pneg %p68
      %p141 = pneg %p65
      %p142 = pneg %p96
      %p143 = pneg %p93
      %s144 = smul.u32 8, %s19
      %p145 = scmp.lt.s32.totalorder %s18, 1
      %s146 = scalar_select %p145, %s18, 1
      %p147 = scmp.lt.s32.totalorder %s144, 15
      %s148 = scalar_select %p147, %s144, 15
      %s149 = smul.addr %s148, 2
      %s150 = smul.addr %s146, 32
      %s151 = sadd.s32 %s149, %s150
      %s152 = smul.addr %s151, 8
      %s153 = scalar_lea.vmem %s3, %s152
      %p154 = scmp.lt.s32.totalorder %s18, 1
      %s155 = scalar_select %p154, %s18, 1
      %s156 = smul.addr %s155, 144
      %s157 = smul.addr %s156, 8
      %s158 = scalar_lea.vmem %s1, %s157
      %s159 = smul.u32 8, %s19
      %p160 = scmp.lt.s32.totalorder %s18, 1
      %s161 = scalar_select %p160, %s18, 1
      %p162 = scmp.lt.s32.totalorder %s159, 15
      %s163 = scalar_select %p162, %s159, 15
      %s164 = smul.addr %s163, 2
      %s165 = smul.addr %s161, 32
      %s166 = sadd.s32 %s164, %s165
      %s167 = smul.addr %s166, 8
      %s168 = scalar_lea.vmem %s3, %s167
      %s169 = smul.u32 8, %s19
      %p170 = scmp.lt.s32.totalorder %s19, 0
      %s171 = ssub.s32 0, %s19
      %s172 = scalar_select %p170, %s171, %s19
      %s173 = sand.u32 %s172, 1
      %s174 = ssub.s32 0, %s173
      %s175 = scalar_select %p170, %s174, %s173
      %p176 = scmp.ne.s32.totalorder %s175, 0
      %p177 = scmp.lt.s32.totalorder %s175, 0
      %p178 = pnand %p177, %p176
      %p179 = pneg %p178
      %s180 = sadd.s32 %s175, 2
      %s181 = scalar_select %p179, %s180, %s175
      %p182 = scmp.eq.s32.totalorder %s19, 0
      // Predicated region
      $region29: #{kwds_conv2d.1} parent=27 // pred_check
        %p183 = pneg %p182
      $region30: #{kwds_conv2d.1} parent=27 // pred_check_branch
        %185 = sbr.rel (%p183) target = $region32
      $region31: #{kwds_conv2d.1} parent=27 // pred_region
        %s186 = smul.u32 %s18, 432
        %s187 = scalar_lea.vmem %s0, %s186
        %p189 = scmp.lt.u32.totalorder 18, 8
        %p190 = pneg %p189
        // Predicated region
        $region33: #{kwds_conv2d.1} parent=31 // pred_check
          _
        $region34: #{kwds_conv2d.1} parent=31 // pred_check_branch
          %192 = sbr.rel (%p189) target = $region36
        $region35: #{kwds_conv2d.1} parent=31 // pred_region
          %s225 = sand.u32 18, 7
          %p226 = scmp.eq.s32.totalorder %s225, 0
          %p227 = pneg %p226
          // Predicated region
          $region48: #{kwds_conv2d.1} parent=35 // pred_check
            _
          $region49: #{kwds_conv2d.1} parent=35 // pred_check_branch
            %229 = sbr.rel (%p226) target = $region51
          $region50: #{kwds_conv2d.1} parent=35 // pred_region
            %s230 = sand.u32 18, 7
            %s231 = ssub.s32 18, %s230
            %s232 = scalar_lea.vmem %s187, %s231
            %s233 = ssub.s32 18, %s230
            %s234 = scalar_lea.vmem [#allocation2], %s233
            loop: start=0, step=1, limit=1
            $region52: #{kwds_conv2d.1} parent=50 // loop_pre_header
              _
            $region53: #{kwds_conv2d.1} parent=50 // loop_header
              %s236 = sphi 0, %s240
              %p237 = scmp.ge.s32.totalorder %s236, 1
              %s241 = sphi %s187, %s187
              %s242 = sphi [#allocation2], [#allocation2]
            $region54: #{kwds_conv2d.1} parent=50 // loop_header_branch
              %239 = sbr.rel (%p237) target = $region58
            $region55: #{kwds_conv2d.1} parent=50 // loop_body
              %v243 = vld [vmem:[%s241] sm:$0xff]
              %244 = vst [vmem:[%s242] sm:$0xff] %v243
              %v245 = vld [vmem:[%s241 + $0x8] sm:$0xff]
              %246 = vst [vmem:[%s242 + $0x8] sm:$0xff] %v245
              %v247 = vld [vmem:[%s241 + $0x18] sm:$0xff]
              %248 = vst [vmem:[%s242 + $0x18] sm:$0xff] %v247
              %v249 = vld [vmem:[%s241 + $0x20] sm:$0xff]
              %250 = vst [vmem:[%s242 + $0x20] sm:$0xff] %v249
              %v251 = vld [vmem:[%s241 + $0x30] sm:$0xff]
              %252 = vst [vmem:[%s242 + $0x30] sm:$0xff] %v251
              %v253 = vld [vmem:[%s241 + $0x38] sm:$0xff]
              %254 = vst [vmem:[%s242 + $0x38] sm:$0xff] %v253
              %v255 = vld [vmem:[%s241 + $0x48] sm:$0xff]
              %256 = vst [vmem:[%s242 + $0x48] sm:$0xff] %v255
              %v257 = vld [vmem:[%s241 + $0x50] sm:$0xff]
              %258 = vst [vmem:[%s242 + $0x50] sm:$0xff] %v257
              %v259 = vld [vmem:[%s241 + $0x60] sm:$0xff]
              %260 = vst [vmem:[%s242 + $0x60] sm:$0xff] %v259
              %v261 = vld [vmem:[%s241 + $0x68] sm:$0xff]
              %262 = vst [vmem:[%s242 + $0x68] sm:$0xff] %v261
              %v263 = vld [vmem:[%s241 + $0x78] sm:$0xff]
              %264 = vst [vmem:[%s242 + $0x78] sm:$0xff] %v263
              %v265 = vld [vmem:[%s241 + $0x80] sm:$0xff]
              %266 = vst [vmem:[%s242 + $0x80] sm:$0xff] %v265
              %v267 = vld [vmem:[%s241 + $0x90] sm:$0xff]
              %268 = vst [vmem:[%s242 + $0x90] sm:$0xff] %v267
              %v269 = vld [vmem:[%s241 + $0x98] sm:$0xff]
              %270 = vst [vmem:[%s242 + $0x98] sm:$0xff] %v269
              %v271 = vld [vmem:[%s241 + $0xa8] sm:$0xff]
              %272 = vst [vmem:[%s242 + $0xa8] sm:$0xff] %v271
              %v273 = vld [vmem:[%s241 + $0xb0] sm:$0xff]
              %274 = vst [vmem:[%s242 + $0xb0] sm:$0xff] %v273
              %v275 = vld [vmem:[%s241 + $0xc0] sm:$0xff]
              %276 = vst [vmem:[%s242 + $0xc0] sm:$0xff] %v275
              %v277 = vld [vmem:[%s241 + $0xc8] sm:$0xff]
              %278 = vst [vmem:[%s242 + $0xc8] sm:$0xff] %v277
              %v279 = vld [vmem:[%s241 + $0xd8] sm:$0xff]
              %280 = vst [vmem:[%s242 + $0xd8] sm:$0xff] %v279
              %v281 = vld [vmem:[%s241 + $0xe0] sm:$0xff]
              %282 = vst [vmem:[%s242 + $0xe0] sm:$0xff] %v281
            $region56: #{kwds_conv2d.1} parent=50 // loop_footer
              %s240 = sadd.s32 1, %s236
            $region57: #{kwds_conv2d.1} parent=50 // loop_footer_branch
              %235 = sbr.rel target = $region53
            $region58: #{kwds_conv2d.1} parent=50 // loop_exit
              _
            %s283 = sshllo.u32 0, %s230
            loop: start=0, step=1, limit=1
            $region59: #{kwds_conv2d.1} parent=50 // loop_pre_header
              _
            $region60: #{kwds_conv2d.1} parent=50 // loop_header
              %s285 = sphi 0, %s289
              %p286 = scmp.ge.s32.totalorder %s285, 1
              %s290 = sphi %s232, %s232
              %s291 = sphi %s234, %s234
            $region61: #{kwds_conv2d.1} parent=50 // loop_header_branch
              %288 = sbr.rel (%p286) target = $region65
            $region62: #{kwds_conv2d.1} parent=50 // loop_body
              %v292 = vld [vmem:[%s290] sm:%s283]
              %293 = vst [vmem:[%s291] sm:%s283] %v292
              %v294 = vld [vmem:[%s290 + $0x18] sm:%s283]
              %295 = vst [vmem:[%s291 + $0x18] sm:%s283] %v294
              %v296 = vld [vmem:[%s290 + $0x30] sm:%s283]
              %297 = vst [vmem:[%s291 + $0x30] sm:%s283] %v296
              %v298 = vld [vmem:[%s290 + $0x48] sm:%s283]
              %299 = vst [vmem:[%s291 + $0x48] sm:%s283] %v298
              %v300 = vld [vmem:[%s290 + $0x60] sm:%s283]
              %301 = vst [vmem:[%s291 + $0x60] sm:%s283] %v300
              %v302 = vld [vmem:[%s290 + $0x78] sm:%s283]
              %303 = vst [vmem:[%s291 + $0x78] sm:%s283] %v302
              %v304 = vld [vmem:[%s290 + $0x90] sm:%s283]
              %305 = vst [vmem:[%s291 + $0x90] sm:%s283] %v304
              %v306 = vld [vmem:[%s290 + $0xa8] sm:%s283]
              %307 = vst [vmem:[%s291 + $0xa8] sm:%s283] %v306
              %v308 = vld [vmem:[%s290 + $0xc0] sm:%s283]
              %309 = vst [vmem:[%s291 + $0xc0] sm:%s283] %v308
              %v310 = vld [vmem:[%s290 + $0xd8] sm:%s283]
              %311 = vst [vmem:[%s291 + $0xd8] sm:%s283] %v310
            $region63: #{kwds_conv2d.1} parent=50 // loop_footer
              %s289 = sadd.s32 1, %s285
            $region64: #{kwds_conv2d.1} parent=50 // loop_footer_branch
              %284 = sbr.rel target = $region60
            $region65: #{kwds_conv2d.1} parent=50 // loop_exit
              _
          $region51: #{kwds_conv2d.1} parent=35 // pred_fallthru
            _
        $region36: #{kwds_conv2d.1} parent=31 // pred_fallthru
          _
        // Predicated region
        $region37: #{kwds_conv2d.1} parent=31 // pred_check
          %p193 = pneg %p189
        $region38: #{kwds_conv2d.1} parent=31 // pred_check_branch
          %195 = sbr.rel (%p193) target = $region40
        $region39: #{kwds_conv2d.1} parent=31 // pred_region
          %s196 = sshllo.u32 0, 18
          loop: start=0, step=1, limit=1
          $region41: #{kwds_conv2d.1} parent=39 // loop_pre_header
            _
          $region42: #{kwds_conv2d.1} parent=39 // loop_header
            %s198 = sphi 0, %s202
            %p199 = scmp.ge.s32.totalorder %s198, 1
            %s203 = sphi %s187, %s187
            %s204 = sphi [#allocation2], [#allocation2]
          $region43: #{kwds_conv2d.1} parent=39 // loop_header_branch
            %201 = sbr.rel (%p199) target = $region47
          $region44: #{kwds_conv2d.1} parent=39 // loop_body
            %v205 = vld [vmem:[%s203] sm:%s196]
            %206 = vst [vmem:[%s204] sm:%s196] %v205
            %v207 = vld [vmem:[%s203 + $0x18] sm:%s196]
            %208 = vst [vmem:[%s204 + $0x18] sm:%s196] %v207
            %v209 = vld [vmem:[%s203 + $0x30] sm:%s196]
            %210 = vst [vmem:[%s204 + $0x30] sm:%s196] %v209
            %v211 = vld [vmem:[%s203 + $0x48] sm:%s196]
            %212 = vst [vmem:[%s204 + $0x48] sm:%s196] %v211
            %v213 = vld [vmem:[%s203 + $0x60] sm:%s196]
            %214 = vst [vmem:[%s204 + $0x60] sm:%s196] %v213
            %v215 = vld [vmem:[%s203 + $0x78] sm:%s196]
            %216 = vst [vmem:[%s204 + $0x78] sm:%s196] %v215
            %v217 = vld [vmem:[%s203 + $0x90] sm:%s196]
            %218 = vst [vmem:[%s204 + $0x90] sm:%s196] %v217
            %v219 = vld [vmem:[%s203 + $0xa8] sm:%s196]
            %220 = vst [vmem:[%s204 + $0xa8] sm:%s196] %v219
            %v221 = vld [vmem:[%s203 + $0xc0] sm:%s196]
            %222 = vst [vmem:[%s204 + $0xc0] sm:%s196] %v221
            %v223 = vld [vmem:[%s203 + $0xd8] sm:%s196]
            %224 = vst [vmem:[%s204 + $0xd8] sm:%s196] %v223
          $region45: #{kwds_conv2d.1} parent=39 // loop_footer
            %s202 = sadd.s32 1, %s198
          $region46: #{kwds_conv2d.1} parent=39 // loop_footer_branch
            %197 = sbr.rel target = $region42
          $region47: #{kwds_conv2d.1} parent=39 // loop_exit
            _
        $region40: #{kwds_conv2d.1} parent=31 // pred_fallthru
          _
        // Predicated region
        $region66: #{kwds_conv2d.1} parent=31 // pred_check
          _
        $region67: #{kwds_conv2d.1} parent=31 // pred_check_branch
          %314 = sbr.rel (0) target = $region69
        $region68: #{kwds_conv2d.1} parent=31 // pred_region
          %315 = vsyncadd [#allocation3], 2880
        $region69: #{kwds_conv2d.1} parent=31 // pred_fallthru
          _
      $region32: #{kwds_conv2d.1} parent=27 // pred_fallthru
        _
      %s316 = sadd.s32 %s19, 1
      %p317 = scmp.lt.s32.totalorder %s316, 2
      // Predicated region
      $region70: #{kwds_conv2d.1} parent=27 // pred_check
        %p318 = pneg %p317
      $region71: #{kwds_conv2d.1} parent=27 // pred_check_branch
        %320 = sbr.rel (%p318) target = $region73
      $region72: #{kwds_conv2d.1} parent=27 // pred_region
        %s321 = ssub.s32 1, %s181
        %s322 = smul.u32 %s316, 8
        %s323 = smul.u32 %s322, 24
        %s324 = smul.u32 %s18, 432
        %s325 = sadd.s32 %s323, %s324
        %s326 = scalar_lea.vmem %s0, %s325
        %s327 = smul.u32 %s321, 240
        %s328 = scalar_lea.vmem [#allocation2], %s327
        %s329 = scalar_lea.sflag [#allocation3], %s321
        %p331 = scmp.lt.u32.totalorder 18, 8
        %p332 = pneg %p331
        // Predicated region
        $region74: #{kwds_conv2d.1} parent=72 // pred_check
          _
        $region75: #{kwds_conv2d.1} parent=72 // pred_check_branch
          %334 = sbr.rel (%p331) target = $region77
        $region76: #{kwds_conv2d.1} parent=72 // pred_region
          %s367 = sand.u32 18, 7
          %p368 = scmp.eq.s32.totalorder %s367, 0
          %p369 = pneg %p368
          // Predicated region
          $region89: #{kwds_conv2d.1} parent=76 // pred_check
            _
          $region90: #{kwds_conv2d.1} parent=76 // pred_check_branch
            %371 = sbr.rel (%p368) target = $region92
          $region91: #{kwds_conv2d.1} parent=76 // pred_region
            %s372 = sand.u32 18, 7
            %s373 = ssub.s32 18, %s372
            %s374 = scalar_lea.vmem %s326, %s373
            %s375 = ssub.s32 18, %s372
            %s376 = scalar_lea.vmem %s328, %s375 [#allocation2]
            loop: start=0, step=1, limit=1
            $region93: #{kwds_conv2d.1} parent=91 // loop_pre_header
              _
            $region94: #{kwds_conv2d.1} parent=91 // loop_header
              %s378 = sphi 0, %s382
              %p379 = scmp.ge.s32.totalorder %s378, 1
              %s383 = sphi %s326, %s326
              %s384 = sphi %s328, %s328
            $region95: #{kwds_conv2d.1} parent=91 // loop_header_branch
              %381 = sbr.rel (%p379) target = $region99
            $region96: #{kwds_conv2d.1} parent=91 // loop_body
              %v385 = vld [vmem:[%s383] sm:$0xff]
              %386 = vst [vmem:[%s384] sm:$0xff] %v385
              %v387 = vld [vmem:[%s383 + $0x8] sm:$0xff]
              %388 = vst [vmem:[%s384 + $0x8] sm:$0xff] %v387
              %v389 = vld [vmem:[%s383 + $0x18] sm:$0xff]
              %390 = vst [vmem:[%s384 + $0x18] sm:$0xff] %v389
              %v391 = vld [vmem:[%s383 + $0x20] sm:$0xff]
              %392 = vst [vmem:[%s384 + $0x20] sm:$0xff] %v391
              %v393 = vld [vmem:[%s383 + $0x30] sm:$0xff]
              %394 = vst [vmem:[%s384 + $0x30] sm:$0xff] %v393
              %v395 = vld [vmem:[%s383 + $0x38] sm:$0xff]
              %396 = vst [vmem:[%s384 + $0x38] sm:$0xff] %v395
              %v397 = vld [vmem:[%s383 + $0x48] sm:$0xff]
              %398 = vst [vmem:[%s384 + $0x48] sm:$0xff] %v397
              %v399 = vld [vmem:[%s383 + $0x50] sm:$0xff]
              %400 = vst [vmem:[%s384 + $0x50] sm:$0xff] %v399
              %v401 = vld [vmem:[%s383 + $0x60] sm:$0xff]
              %402 = vst [vmem:[%s384 + $0x60] sm:$0xff] %v401
              %v403 = vld [vmem:[%s383 + $0x68] sm:$0xff]
              %404 = vst [vmem:[%s384 + $0x68] sm:$0xff] %v403
              %v405 = vld [vmem:[%s383 + $0x78] sm:$0xff]
              %406 = vst [vmem:[%s384 + $0x78] sm:$0xff] %v405
              %v407 = vld [vmem:[%s383 + $0x80] sm:$0xff]
              %408 = vst [vmem:[%s384 + $0x80] sm:$0xff] %v407
              %v409 = vld [vmem:[%s383 + $0x90] sm:$0xff]
              %410 = vst [vmem:[%s384 + $0x90] sm:$0xff] %v409
              %v411 = vld [vmem:[%s383 + $0x98] sm:$0xff]
              %412 = vst [vmem:[%s384 + $0x98] sm:$0xff] %v411
              %v413 = vld [vmem:[%s383 + $0xa8] sm:$0xff]
              %414 = vst [vmem:[%s384 + $0xa8] sm:$0xff] %v413
              %v415 = vld [vmem:[%s383 + $0xb0] sm:$0xff]
              %416 = vst [vmem:[%s384 + $0xb0] sm:$0xff] %v415
              %v417 = vld [vmem:[%s383 + $0xc0] sm:$0xff]
              %418 = vst [vmem:[%s384 + $0xc0] sm:$0xff] %v417
              %v419 = vld [vmem:[%s383 + $0xc8] sm:$0xff]
              %420 = vst [vmem:[%s384 + $0xc8] sm:$0xff] %v419
              %v421 = vld [vmem:[%s383 + $0xd8] sm:$0xff]
              %422 = vst [vmem:[%s384 + $0xd8] sm:$0xff] %v421
              %v423 = vld [vmem:[%s383 + $0xe0] sm:$0xff]
              %424 = vst [vmem:[%s384 + $0xe0] sm:$0xff] %v423
            $region97: #{kwds_conv2d.1} parent=91 // loop_footer
              %s382 = sadd.s32 1, %s378
            $region98: #{kwds_conv2d.1} parent=91 // loop_footer_branch
              %377 = sbr.rel target = $region94
            $region99: #{kwds_conv2d.1} parent=91 // loop_exit
              _
            %s425 = sshllo.u32 0, %s372
            loop: start=0, step=1, limit=1
            $region100: #{kwds_conv2d.1} parent=91 // loop_pre_header
              _
            $region101: #{kwds_conv2d.1} parent=91 // loop_header
              %s427 = sphi 0, %s431
              %p428 = scmp.ge.s32.totalorder %s427, 1
              %s432 = sphi %s374, %s374
              %s433 = sphi %s376, %s376
            $region102: #{kwds_conv2d.1} parent=91 // loop_header_branch
              %430 = sbr.rel (%p428) target = $region106
            $region103: #{kwds_conv2d.1} parent=91 // loop_body
              %v434 = vld [vmem:[%s432] sm:%s425]
              %435 = vst [vmem:[%s433] sm:%s425] %v434
              %v436 = vld [vmem:[%s432 + $0x18] sm:%s425]
              %437 = vst [vmem:[%s433 + $0x18] sm:%s425] %v436
              %v438 = vld [vmem:[%s432 + $0x30] sm:%s425]
              %439 = vst [vmem:[%s433 + $0x30] sm:%s425] %v438
              %v440 = vld [vmem:[%s432 + $0x48] sm:%s425]
              %441 = vst [vmem:[%s433 + $0x48] sm:%s425] %v440
              %v442 = vld [vmem:[%s432 + $0x60] sm:%s425]
              %443 = vst [vmem:[%s433 + $0x60] sm:%s425] %v442
              %v444 = vld [vmem:[%s432 + $0x78] sm:%s425]
              %445 = vst [vmem:[%s433 + $0x78] sm:%s425] %v444
              %v446 = vld [vmem:[%s432 + $0x90] sm:%s425]
              %447 = vst [vmem:[%s433 + $0x90] sm:%s425] %v446
              %v448 = vld [vmem:[%s432 + $0xa8] sm:%s425]
              %449 = vst [vmem:[%s433 + $0xa8] sm:%s425] %v448
              %v450 = vld [vmem:[%s432 + $0xc0] sm:%s425]
              %451 = vst [vmem:[%s433 + $0xc0] sm:%s425] %v450
              %v452 = vld [vmem:[%s432 + $0xd8] sm:%s425]
              %453 = vst [vmem:[%s433 + $0xd8] sm:%s425] %v452
            $region104: #{kwds_conv2d.1} parent=91 // loop_footer
              %s431 = sadd.s32 1, %s427
            $region105: #{kwds_conv2d.1} parent=91 // loop_footer_branch
              %426 = sbr.rel target = $region101
            $region106: #{kwds_conv2d.1} parent=91 // loop_exit
              _
          $region92: #{kwds_conv2d.1} parent=76 // pred_fallthru
            _
        $region77: #{kwds_conv2d.1} parent=72 // pred_fallthru
          _
        // Predicated region
        $region78: #{kwds_conv2d.1} parent=72 // pred_check
          %p335 = pneg %p331
        $region79: #{kwds_conv2d.1} parent=72 // pred_check_branch
          %337 = sbr.rel (%p335) target = $region81
        $region80: #{kwds_conv2d.1} parent=72 // pred_region
          %s338 = sshllo.u32 0, 18
          loop: start=0, step=1, limit=1
          $region82: #{kwds_conv2d.1} parent=80 // loop_pre_header
            _
          $region83: #{kwds_conv2d.1} parent=80 // loop_header
            %s340 = sphi 0, %s344
            %p341 = scmp.ge.s32.totalorder %s340, 1
            %s345 = sphi %s326, %s326
            %s346 = sphi %s328, %s328
          $region84: #{kwds_conv2d.1} parent=80 // loop_header_branch
            %343 = sbr.rel (%p341) target = $region88
          $region85: #{kwds_conv2d.1} parent=80 // loop_body
            %v347 = vld [vmem:[%s345] sm:%s338]
            %348 = vst [vmem:[%s346] sm:%s338] %v347
            %v349 = vld [vmem:[%s345 + $0x18] sm:%s338]
            %350 = vst [vmem:[%s346 + $0x18] sm:%s338] %v349
            %v351 = vld [vmem:[%s345 + $0x30] sm:%s338]
            %352 = vst [vmem:[%s346 + $0x30] sm:%s338] %v351
            %v353 = vld [vmem:[%s345 + $0x48] sm:%s338]
            %354 = vst [vmem:[%s346 + $0x48] sm:%s338] %v353
            %v355 = vld [vmem:[%s345 + $0x60] sm:%s338]
            %356 = vst [vmem:[%s346 + $0x60] sm:%s338] %v355
            %v357 = vld [vmem:[%s345 + $0x78] sm:%s338]
            %358 = vst [vmem:[%s346 + $0x78] sm:%s338] %v357
            %v359 = vld [vmem:[%s345 + $0x90] sm:%s338]
            %360 = vst [vmem:[%s346 + $0x90] sm:%s338] %v359
            %v361 = vld [vmem:[%s345 + $0xa8] sm:%s338]
            %362 = vst [vmem:[%s346 + $0xa8] sm:%s338] %v361
            %v363 = vld [vmem:[%s345 + $0xc0] sm:%s338]
            %364 = vst [vmem:[%s346 + $0xc0] sm:%s338] %v363
            %v365 = vld [vmem:[%s345 + $0xd8] sm:%s338]
            %366 = vst [vmem:[%s346 + $0xd8] sm:%s338] %v365
          $region86: #{kwds_conv2d.1} parent=80 // loop_footer
            %s344 = sadd.s32 1, %s340
          $region87: #{kwds_conv2d.1} parent=80 // loop_footer_branch
            %339 = sbr.rel target = $region83
          $region88: #{kwds_conv2d.1} parent=80 // loop_exit
            _
        $region81: #{kwds_conv2d.1} parent=72 // pred_fallthru
          _
        // Predicated region
        $region107: #{kwds_conv2d.1} parent=72 // pred_check
          _
        $region108: #{kwds_conv2d.1} parent=72 // pred_check_branch
          %456 = sbr.rel (0) target = $region110
        $region109: #{kwds_conv2d.1} parent=72 // pred_region
          %457 = vsyncadd %s329, 2880
        $region110: #{kwds_conv2d.1} parent=72 // pred_fallthru
          _
      $region73: #{kwds_conv2d.1} parent=27 // pred_fallthru
        _
      %s458 = smul.u32 %s181, 240
      %s459 = scalar_lea.vmem [#allocation2], %s458
      %s460 = scalar_lea.sflag [#allocation3], %s181
      %s461 = smul.u32 10, 18
      %s462 = smul.u32 %s461, 1
      %s463 = sshll.u32 %s462, 4
      %464 = dma.done %s460, %s463
      %v465 = vld [vmem:[%s459] sm:$0xff]
      %v466 = vld [vmem:[%s459 + $0x8] sm:$0xff]
      %v467 = vld [vmem:[%s459 + $0x18] sm:$0xff]
      %v468 = vld [vmem:[%s459 + $0x20] sm:$0xff]
      %v469 = vld [vmem:[%s459 + $0x30] sm:$0xff]
      %v470 = vld [vmem:[%s459 + $0x38] sm:$0xff]
      %v471 = vld [vmem:[%s459 + $0x48] sm:$0xff]
      %v472 = vld [vmem:[%s459 + $0x50] sm:$0xff]
      %v473 = vld [vmem:[%s459 + $0x60] sm:$0xff]
      %v474 = vld [vmem:[%s459 + $0x68] sm:$0xff]
      %v475 = vld [vmem:[%s459 + $0x78] sm:$0xff]
      %v476 = vld [vmem:[%s459 + $0x80] sm:$0xff]
      %v477 = vld [vmem:[%s459 + $0x90] sm:$0xff]
      %v478 = vld [vmem:[%s459 + $0x98] sm:$0xff]
      %v479 = vld [vmem:[%s459 + $0xa8] sm:$0xff]
      %v480 = vld [vmem:[%s459 + $0xb0] sm:$0xff]
      %v481 = vld [vmem:[%s158] sm:$0xff]
      %v482 = vld [vmem:[%s158 + $0x8] sm:$0xff]
      %v483 = vld [vmem:[%s158 + $0x10] sm:$0xff]
      %v484 = vld [vmem:[%s158 + $0x18] sm:$0xff]
      %v485 = vld [vmem:[%s158 + $0x20] sm:$0xff]
      %v486 = vld [vmem:[%s158 + $0x28] sm:$0xff]
      %v487 = vld [vmem:[%s158 + $0x30] sm:$0xff]
      %v488 = vld [vmem:[%s158 + $0x38] sm:$0xff]
      %v489 = vld [vmem:[%s158 + $0x40] sm:$0xff]
      %v490 = vld [vmem:[%s158 + $0x48] sm:$0xff]
      %v491 = vld [vmem:[%s158 + $0x50] sm:$0xff]
      %v492 = vld [vmem:[%s158 + $0x58] sm:$0xff]
      %v493 = vld [vmem:[%s158 + $0x60] sm:$0xff]
      %v494 = vld [vmem:[%s158 + $0x68] sm:$0xff]
      %v495 = vld [vmem:[%s158 + $0x70] sm:$0xff]
      %v496 = vld [vmem:[%s158 + $0x78] sm:$0xff]
      %v497 = vld [vmem:[%s459 + $0x1] sm:$0xff]
      %v498 = vld [vmem:[%s459 + $0x9] sm:$0xff]
      %v499 = vld [vmem:[%s459 + $0x19] sm:$0xff]
      %v500 = vld [vmem:[%s459 + $0x21] sm:$0xff]
      %v501 = vld [vmem:[%s459 + $0x31] sm:$0xff]
      %v502 = vld [vmem:[%s459 + $0x39] sm:$0xff]
      %v503 = vld [vmem:[%s459 + $0x49] sm:$0xff]
      %v504 = vld [vmem:[%s459 + $0x51] sm:$0xff]
      %v505 = vld [vmem:[%s459 + $0x61] sm:$0xff]
      %v506 = vld [vmem:[%s459 + $0x69] sm:$0xff]
      %v507 = vld [vmem:[%s459 + $0x79] sm:$0xff]
      %v508 = vld [vmem:[%s459 + $0x81] sm:$0xff]
      %v509 = vld [vmem:[%s459 + $0x91] sm:$0xff]
      %v510 = vld [vmem:[%s459 + $0x99] sm:$0xff]
      %v511 = vld [vmem:[%s459 + $0xa9] sm:$0xff]
      %v512 = vld [vmem:[%s459 + $0xb1] sm:$0xff]
      %s513 = scalar_lea.vmem %s158, 128
      %v514 = vld [vmem:[%s513] sm:$0xff]
      %v515 = vld [vmem:[%s513 + $0x8] sm:$0xff]
      %v516 = vld [vmem:[%s513 + $0x10] sm:$0xff]
      %v517 = vld [vmem:[%s513 + $0x18] sm:$0xff]
      %v518 = vld [vmem:[%s513 + $0x20] sm:$0xff]
      %v519 = vld [vmem:[%s513 + $0x28] sm:$0xff]
      %v520 = vld [vmem:[%s513 + $0x30] sm:$0xff]
      %v521 = vld [vmem:[%s513 + $0x38] sm:$0xff]
      %v522 = vld [vmem:[%s513 + $0x40] sm:$0xff]
      %v523 = vld [vmem:[%s513 + $0x48] sm:$0xff]
      %v524 = vld [vmem:[%s513 + $0x50] sm:$0xff]
      %v525 = vld [vmem:[%s513 + $0x58] sm:$0xff]
      %v526 = vld [vmem:[%s513 + $0x60] sm:$0xff]
      %v527 = vld [vmem:[%s513 + $0x68] sm:$0xff]
      %v528 = vld [vmem:[%s513 + $0x70] sm:$0xff]
      %v529 = vld [vmem:[%s513 + $0x78] sm:$0xff]
      %530 = vmatprep.subr.mxu0 0.0
      %531 = vmatpush1.msra.mxu0 %v514
      %532 = vmatprep.subr.mxu0 0.0
      %533 = vmatpush1.msra.mxu0 %v515
      %534 = vmatprep.subr.mxu0 0.0
      %535 = vmatpush1.msra.mxu0 %v516
      %536 = vmatprep.subr.mxu0 0.0
      %537 = vmatpush1.msra.mxu0 %v517
      %538 = vmatprep.subr.mxu0 0.0
      %539 = vmatpush1.msra.mxu0 %v518
      %540 = vmatprep.subr.mxu0 0.0
      %541 = vmatpush1.msra.mxu0 %v519
      %542 = vmatprep.subr.mxu0 0.0
      %543 = vmatpush1.msra.mxu0 %v520
      %544 = vmatprep.subr.mxu0 0.0
      %545 = vmatpush1.msra.mxu0 %v521
      %546 = vmatprep.subr.mxu0 0.0
      %547 = vmatpush1.msra.mxu0 %v522
      %548 = vmatprep.subr.mxu0 0.0
      %549 = vmatpush1.msra.mxu0 %v523
      %550 = vmatprep.subr.mxu0 0.0
      %551 = vmatpush1.msra.mxu0 %v524
      %552 = vmatprep.subr.mxu0 0.0
      %553 = vmatpush1.msra.mxu0 %v525
      %554 = vmatprep.subr.mxu0 0.0
      %555 = vmatpush1.msra.mxu0 %v526
      %556 = vmatprep.subr.mxu0 0.0
      %557 = vmatpush1.msra.mxu0 %v527
      %558 = vmatprep.subr.mxu0 0.0
      %559 = vmatpush1.msra.mxu0 %v528
      %560 = vmatprep.subr.mxu0 0.0
      %561 = vmatpush1.msra.mxu0 %v529
      %562 = vmatprep.subr.mxu0 0.0
      %563 = vmatpush1.msra.mxu0 0.0
      %564 = vmatprep.subr.mxu0 0.0
      %565 = vmatpush1.msra.mxu0 0.0
      %566 = vmatprep.subr.mxu0 0.0
      %567 = vmatpush1.msra.mxu0 0.0
      %568 = vmatprep.subr.mxu0 0.0
      %569 = vmatpush1.msra.mxu0 0.0
      %570 = vmatprep.subr.mxu0 0.0
      %571 = vmatpush1.msra.mxu0 0.0
      %572 = vmatprep.subr.mxu0 0.0
      %573 = vmatpush1.msra.mxu0 0.0
      %574 = vmatprep.subr.mxu0 0.0
      %575 = vmatpush1.msra.mxu0 0.0
      %576 = vmatprep.subr.mxu0 0.0
      %577 = vmatpush1.msra.mxu0 0.0
      %578 = vmatprep.subr.mxu0 0.0
      %579 = vmatpush1.msra.mxu0 0.0
      %580 = vmatprep.subr.mxu0 0.0
      %581 = vmatpush1.msra.mxu0 0.0
      %582 = vmatprep.subr.mxu0 0.0
      %583 = vmatpush1.msra.mxu0 0.0
      %584 = vmatprep.subr.mxu0 0.0
      %585 = vmatpush1.msra.mxu0 0.0
      %586 = vmatprep.subr.mxu0 0.0
      %587 = vmatpush1.msra.mxu0 0.0
      %588 = vmatprep.subr.mxu0 0.0
      %589 = vmatpush1.msra.mxu0 0.0
      %590 = vmatprep.subr.mxu0 0.0
      %591 = vmatpush1.msra.mxu0 0.0
      %592 = vmatprep.subr.mxu0 0.0
      %593 = vmatpush1.msra.mxu0 0.0
      %594 = vmatprep.mubr.f32.mxu0 0.0
      %595 = vmatmul.mubr.f32.gmra.mrb[0].mxu0 %v497
      %v596 = vpop.f32.mrb[0].mxu0
      %v597 = vadd.f32 0.0, %v596
      %v598 = vpop.f32.mrb[0].mxu0
      %599 = vmatprep.mubr.f32.mxu0 0.0
      %600 = vmatmul.mubr.f32.gmra.mrb[0].mxu0 %v498
      %v601 = vpop.f32.mrb[0].mxu0
      %v602 = vadd.f32 0.0, %v601
      %v603 = vpop.f32.mrb[0].mxu0
      %604 = vmatprep.mubr.f32.mxu0 0.0
      %605 = vmatmul.mubr.f32.gmra.mrb[0].mxu0 %v499
      %v606 = vpop.f32.mrb[0].mxu0
      %v607 = vadd.f32 0.0, %v606
      %v608 = vpop.f32.mrb[0].mxu0
      %609 = vmatprep.mubr.f32.mxu0 0.0
      %610 = vmatmul.mubr.f32.gmra.mrb[0].mxu0 %v500
      %v611 = vpop.f32.mrb[0].mxu0
      %v612 = vadd.f32 0.0, %v611
      %v613 = vpop.f32.mrb[0].mxu0
      %614 = vmatprep.mubr.f32.mxu0 0.0
      %615 = vmatmul.mubr.f32.gmra.mrb[0].mxu0 %v501
      %v616 = vpop.f32.mrb[0].mxu0
      %v617 = vadd.f32 0.0, %v616
      %v618 = vpop.f32.mrb[0].mxu0
      %619 = vmatprep.mubr.f32.mxu0 0.0
      %620 = vmatmul.mubr.f32.gmra.mrb[0].mxu0 %v502
      %v621 = vpop.f32.mrb[0].mxu0
      %v622 = vadd.f32 0.0, %v621
      %v623 = vpop.f32.mrb[0].mxu0
      %624 = vmatprep.mubr.f32.mxu0 0.0
      %625 = vmatmul.mubr.f32.gmra.mrb[0].mxu0 %v503
      %v626 = vpop.f32.mrb[0].mxu0
      %v627 = vadd.f32 0.0, %v626
      %v628 = vpop.f32.mrb[0].mxu0
      %629 = vmatprep.mubr.f32.mxu0 0.0
      %630 = vmatmul.mubr.f32.gmra.mrb[0].mxu0 %v504
      %v631 = vpop.f32.mrb[0].mxu0
      %v632 = vadd.f32 0.0, %v631
      %v633 = vpop.f32.mrb[0].mxu0
      %634 = vmatprep.mubr.f32.mxu0 0.0
      %635 = vmatmul.mubr.f32.gmra.mrb[0].mxu0 %v505
      %v636 = vpop.f32.mrb[0].mxu0
      %v637 = vadd.f32 0.0, %v636
      %v638 = vpop.f32.mrb[0].mxu0
      %639 = vmatprep.mubr.f32.mxu0 0.0
      %640 = vmatmul.mubr.f32.gmra.mrb[0].mxu0 %v506
      %v641 = vpop.f32.mrb[0].mxu0
      %v642 = vadd.f32 0.0, %v641
      %v643 = vpop.f32.mrb[0].mxu0
      %644 = vmatprep.mubr.f32.mxu0 0.0
      %645 = vmatmul.mubr.f32.gmra.mrb[0].mxu0 %v507
      %v646 = vpop.f32.mrb[0].mxu0
      %v647 = vadd.f32 0.0, %v646
      %v648 = vpop.f32.mrb[0].mxu0
      %649 = vmatprep.mubr.f32.mxu0 0.0
      %650 = vmatmul.mubr.f32.gmra.mrb[0].mxu0 %v508
      %v651 = vpop.f32.mrb[0].mxu0
      %v652 = vadd.f32 0.0, %v651
      %v653 = vpop.f32.mrb[0].mxu0
      %654 = vmatprep.mubr.f32.mxu0 0.0
      %655 = vmatmul.mubr.f32.gmra.mrb[0].mxu0 %v509
      %v656 = vpop.f32.mrb[0].mxu0
      %v657 = vadd.f32 0.0, %v656
      %v658 = vpop.f32.mrb[0].mxu0
      %659 = vmatprep.mubr.f32.mxu0 0.0
      %660 = vmatmul.mubr.f32.gmra.mrb[0].mxu0 %v510
      %v661 = vpop.f32.mrb[0].mxu0
      %v662 = vadd.f32 0.0, %v661
      %v663 = vpop.f32.mrb[0].mxu0
      %664 = vmatprep.mubr.f32.mxu0 0.0
      %665 = vmatmul.mubr.f32.gmra.mrb[0].mxu0 %v511
      %v666 = vpop.f32.mrb[0].mxu0
      %v667 = vadd.f32 0.0, %v666
      %v668 = vpop.f32.mrb[0].mxu0
      %669 = vmatprep.mubr.f32.mxu0 0.0
      %670 = vmatmul.mubr.f32.gmra.mrb[0].mxu0 %v512
      %v671 = vpop.f32.mrb[0].mxu0
      %v672 = vadd.f32 0.0, %v671
      %v673 = vpop.f32.mrb[0].mxu0
      %674 = vdwg.mxu0
      %675 = vmatprep.subr.mxu0 0.0
      %676 = vmatpush1.msra.mxu0 %v481
      %677 = vmatprep.subr.mxu0 0.0
      %678 = vmatpush1.msra.mxu0 %v482
      %679 = vmatprep.subr.mxu0 0.0
      %680 = vmatpush1.msra.mxu0 %v483
      %681 = vmatprep.subr.mxu0 0.0
      %682 = vmatpush1.msra.mxu0 %v484
      %683 = vmatprep.subr.mxu0 0.0
      %684 = vmatpush1.msra.mxu0 %v485
      %685 = vmatprep.subr.mxu0 0.0
      %686 = vmatpush1.msra.mxu0 %v486
      %687 = vmatprep.subr.mxu0 0.0
      %688 = vmatpush1.msra.mxu0 %v487
      %689 = vmatprep.subr.mxu0 0.0
      %690 = vmatpush1.msra.mxu0 %v488
      %691 = vmatprep.subr.mxu0 0.0
      %692 = vmatpush1.msra.mxu0 %v489
      %693 = vmatprep.subr.mxu0 0.0
      %694 = vmatpush1.msra.mxu0 %v490
      %695 = vmatprep.subr.mxu0 0.0
      %696 = vmatpush1.msra.mxu0 %v491
      %697 = vmatprep.subr.mxu0 0.0
      %698 = vmatpush1.msra.mxu0 %v492
      %699 = vmatprep.subr.mxu0 0.0
      %700 = vmatpush1.msra.mxu0 %v493
      %701 = vmatprep.subr.mxu0 0.0
      %702 = vmatpush1.msra.mxu0 %v494
      %703 = vmatprep.subr.mxu0 0.0
      %704 = vmatpush1.msra.mxu0 %v495
      %705 = vmatprep.subr.mxu0 0.0
      %706 = vmatpush1.msra.mxu0 %v496
      %707 = vmatprep.subr.mxu0 0.0
      %708 = vmatpush1.msra.mxu0 0.0
      %709 = vmatprep.subr.mxu0 0.0
      %710 = vmatpush1.msra.mxu0 0.0
      %711 = vmatprep.subr.mxu0 0.0
      %712 = vmatpush1.msra.mxu0 0.0
      %713 = vmatprep.subr.mxu0 0.0
      %714 = vmatpush1.msra.mxu0 0.0
      %715 = vmatprep.subr.mxu0 0.0
      %716 = vmatpush1.msra.mxu0 0.0
      %717 = vmatprep.subr.mxu0 0.0
      %718 = vmatpush1.msra.mxu0 0.0
      %719 = vmatprep.subr.mxu0 0.0
      %720 = vmatpush1.msra.mxu0 0.0
      %721 = vmatprep.subr.mxu0 0.0
      %722 = vmatpush1.msra.mxu0 0.0
      %723 = vmatprep.subr.mxu0 0.0
      %724 = vmatpush1.msra.mxu0 0.0
      %725 = vmatprep.subr.mxu0 0.0
      %726 = vmatpush1.msra.mxu0 0.0
      %727 = vmatprep.subr.mxu0 0.0
      %728 = vmatpush1.msra.mxu0 0.0
      %729 = vmatprep.subr.mxu0 0.0
      %730 = vmatpush1.msra.mxu0 0.0
      %731 = vmatprep.subr.mxu0 0.0
      %732 = vmatpush1.msra.mxu0 0.0
      %733 = vmatprep.subr.mxu0 0.0
      %734 = vmatpush1.msra.mxu0 0.0
      %735 = vmatprep.subr.mxu0 0.0
      %736 = vmatpush1.msra.mxu0 0.0
      %737 = vmatprep.subr.mxu0 0.0
      %738 = vmatpush1.msra.mxu0 0.0
      %739 = vmatprep.mubr.f32.mxu0 0.0
      %740 = vmatmul.mubr.f32.gmra.mrb[0].mxu0 %v465
      %v741 = vpop.f32.mrb[0].mxu0
      %v742 = vadd.f32 %v597, %v741
      %v743 = vpop.f32.mrb[0].mxu0
      %744 = vmatprep.mubr.f32.mxu0 0.0
      %745 = vmatmul.mubr.f32.gmra.mrb[0].mxu0 %v466
      %v746 = vpop.f32.mrb[0].mxu0
      %v747 = vadd.f32 %v602, %v746
      %v748 = vpop.f32.mrb[0].mxu0
      %749 = vmatprep.mubr.f32.mxu0 0.0
      %750 = vmatmul.mubr.f32.gmra.mrb[0].mxu0 %v467
      %v751 = vpop.f32.mrb[0].mxu0
      %v752 = vadd.f32 %v607, %v751
      %v753 = vpop.f32.mrb[0].mxu0
      %754 = vmatprep.mubr.f32.mxu0 0.0
      %755 = vmatmul.mubr.f32.gmra.mrb[0].mxu0 %v468
      %v756 = vpop.f32.mrb[0].mxu0
      %v757 = vadd.f32 %v612, %v756
      %v758 = vpop.f32.mrb[0].mxu0
      %759 = vmatprep.mubr.f32.mxu0 0.0
      %760 = vmatmul.mubr.f32.gmra.mrb[0].mxu0 %v469
      %v761 = vpop.f32.mrb[0].mxu0
      %v762 = vadd.f32 %v617, %v761
      %v763 = vpop.f32.mrb[0].mxu0
      %764 = vmatprep.mubr.f32.mxu0 0.0
      %765 = vmatmul.mubr.f32.gmra.mrb[0].mxu0 %v470
      %v766 = vpop.f32.mrb[0].mxu0
      %v767 = vadd.f32 %v622, %v766
      %v768 = vpop.f32.mrb[0].mxu0
      %769 = vmatprep.mubr.f32.mxu0 0.0
      %770 = vmatmul.mubr.f32.gmra.mrb[0].mxu0 %v471
      %v771 = vpop.f32.mrb[0].mxu0
      %v772 = vadd.f32 %v627, %v771
      %v773 = vpop.f32.mrb[0].mxu0
      %774 = vmatprep.mubr.f32.mxu0 0.0
      %775 = vmatmul.mubr.f32.gmra.mrb[0].mxu0 %v472
      %v776 = vpop.f32.mrb[0].mxu0
      %v777 = vadd.f32 %v632, %v776
      %v778 = vpop.f32.mrb[0].mxu0
      %779 = vmatprep.mubr.f32.mxu0 0.0
      %780 = vmatmul.mubr.f32.gmra.mrb[0].mxu0 %v473
      %v781 = vpop.f32.mrb[0].mxu0
      %v782 = vadd.f32 %v637, %v781
      %v783 = vpop.f32.mrb[0].mxu0
      %784 = vmatprep.mubr.f32.mxu0 0.0
      %785 = vmatmul.mubr.f32.gmra.mrb[0].mxu0 %v474
      %v786 = vpop.f32.mrb[0].mxu0
      %v787 = vadd.f32 %v642, %v786
      %v788 = vpop.f32.mrb[0].mxu0
      %789 = vmatprep.mubr.f32.mxu0 0.0
      %790 = vmatmul.mubr.f32.gmra.mrb[0].mxu0 %v475
      %v791 = vpop.f32.mrb[0].mxu0
      %v792 = vadd.f32 %v647, %v791
      %v793 = vpop.f32.mrb[0].mxu0
      %794 = vmatprep.mubr.f32.mxu0 0.0
      %795 = vmatmul.mubr.f32.gmra.mrb[0].mxu0 %v476
      %v796 = vpop.f32.mrb[0].mxu0
      %v797 = vadd.f32 %v652, %v796
      %v798 = vpop.f32.mrb[0].mxu0
      %799 = vmatprep.mubr.f32.mxu0 0.0
      %800 = vmatmul.mubr.f32.gmra.mrb[0].mxu0 %v477
      %v801 = vpop.f32.mrb[0].mxu0
      %v802 = vadd.f32 %v657, %v801
      %v803 = vpop.f32.mrb[0].mxu0
      %804 = vmatprep.mubr.f32.mxu0 0.0
      %805 = vmatmul.mubr.f32.gmra.mrb[0].mxu0 %v478
      %v806 = vpop.f32.mrb[0].mxu0
      %v807 = vadd.f32 %v662, %v806
      %v808 = vpop.f32.mrb[0].mxu0
      %809 = vmatprep.mubr.f32.mxu0 0.0
      %810 = vmatmul.mubr.f32.gmra.mrb[0].mxu0 %v479
      %v811 = vpop.f32.mrb[0].mxu0
      %v812 = vadd.f32 %v667, %v811
      %v813 = vpop.f32.mrb[0].mxu0
      %814 = vmatprep.mubr.f32.mxu0 0.0
      %815 = vmatmul.mubr.f32.gmra.mrb[0].mxu0 %v480
      %v816 = vpop.f32.mrb[0].mxu0
      %v817 = vadd.f32 %v672, %v816
      %v818 = vpop.f32.mrb[0].mxu0
      %819 = vdwg.mxu0
      %v820 = vld [vmem:[%s459 + $0x2] sm:$0xff]
      %v821 = vld [vmem:[%s459 + $0xa] sm:$0xff]
      %v822 = vld [vmem:[%s459 + $0x1a] sm:$0xff]
      %v823 = vld [vmem:[%s459 + $0x22] sm:$0xff]
      %v824 = vld [vmem:[%s459 + $0x32] sm:$0xff]
      %v825 = vld [vmem:[%s459 + $0x3a] sm:$0xff]
      %v826 = vld [vmem:[%s459 + $0x4a] sm:$0xff]
      %v827 = vld [vmem:[%s459 + $0x52] sm:$0xff]
      %v828 = vld [vmem:[%s459 + $0x62] sm:$0xff]
      %v829 = vld [vmem:[%s459 + $0x6a] sm:$0xff]
      %v830 = vld [vmem:[%s459 + $0x7a] sm:$0xff]
      %v831 = vld [vmem:[%s459 + $0x82] sm:$0xff]
      %v832 = vld [vmem:[%s459 + $0x92] sm:$0xff]
      %v833 = vld [vmem:[%s459 + $0x9a] sm:$0xff]
      %v834 = vld [vmem:[%s459 + $0xaa] sm:$0xff]
      %v835 = vld [vmem:[%s459 + $0xb2] sm:$0xff]
      %s836 = scalar_lea.vmem %s158, 256
      %v837 = vld [vmem:[%s836] sm:$0xff]
      %v838 = vld [vmem:[%s836 + $0x8] sm:$0xff]
      %v839 = vld [vmem:[%s836 + $0x10] sm:$0xff]
      %v840 = vld [vmem:[%s836 + $0x18] sm:$0xff]
      %v841 = vld [vmem:[%s836 + $0x20] sm:$0xff]
      %v842 = vld [vmem:[%s836 + $0x28] sm:$0xff]
      %v843 = vld [vmem:[%s836 + $0x30] sm:$0xff]
      %v844 = vld [vmem:[%s836 + $0x38] sm:$0xff]
      %v845 = vld [vmem:[%s836 + $0x40] sm:$0xff]
      %v846 = vld [vmem:[%s836 + $0x48] sm:$0xff]
      %v847 = vld [vmem:[%s836 + $0x50] sm:$0xff]
      %v848 = vld [vmem:[%s836 + $0x58] sm:$0xff]
      %v849 = vld [vmem:[%s836 + $0x60] sm:$0xff]
      %v850 = vld [vmem:[%s836 + $0x68] sm:$0xff]
      %v851 = vld [vmem:[%s836 + $0x70] sm:$0xff]
      %v852 = vld [vmem:[%s836 + $0x78] sm:$0xff]
      %853 = vmatprep.subr.mxu0 0.0
      %854 = vmatpush1.msra.mxu0 %v837
      %855 = vmatprep.subr.mxu0 0.0
      %856 = vmatpush1.msra.mxu0 %v838
      %857 = vmatprep.subr.mxu0 0.0
      %858 = vmatpush1.msra.mxu0 %v839
      %859 = vmatprep.subr.mxu0 0.0
      %860 = vmatpush1.msra.mxu0 %v840
      %861 = vmatprep.subr.mxu0 0.0
      %862 = vmatpush1.msra.mxu0 %v841
      %863 = vmatprep.subr.mxu0 0.0
      %864 = vmatpush1.msra.mxu0 %v842
      %865 = vmatprep.subr.mxu0 0.0
      %866 = vmatpush1.msra.mxu0 %v843
      %867 = vmatprep.subr.mxu0 0.0
      %868 = vmatpush1.msra.mxu0 %v844
      %869 = vmatprep.subr.mxu0 0.0
      %870 = vmatpush1.msra.mxu0 %v845
      %871 = vmatprep.subr.mxu0 0.0
      %872 = vmatpush1.msra.mxu0 %v846
      %873 = vmatprep.subr.mxu0 0.0
      %874 = vmatpush1.msra.mxu0 %v847
      %875 = vmatprep.subr.mxu0 0.0
      %876 = vmatpush1.msra.mxu0 %v848
      %877 = vmatprep.subr.mxu0 0.0
      %878 = vmatpush1.msra.mxu0 %v849
      %879 = vmatprep.subr.mxu0 0.0
      %880 = vmatpush1.msra.mxu0 %v850
      %881 = vmatprep.subr.mxu0 0.0
      %882 = vmatpush1.msra.mxu0 %v851
      %883 = vmatprep.subr.mxu0 0.0
      %884 = vmatpush1.msra.mxu0 %v852
      %885 = vmatprep.subr.mxu0 0.0
      %886 = vmatpush1.msra.mxu0 0.0
      %887 = vmatprep.subr.mxu0 0.0
      %888 = vmatpush1.msra.mxu0 0.0
      %889 = vmatprep.subr.mxu0 0.0
      %890 = vmatpush1.msra.mxu0 0.0
      %891 = vmatprep.subr.mxu0 0.0
      %892 = vmatpush1.msra.mxu0 0.0
      %893 = vmatprep.subr.mxu0 0.0
      %894 = vmatpush1.msra.mxu0 0.0
      %895 = vmatprep.subr.mxu0 0.0
      %896 = vmatpush1.msra.mxu0 0.0
      %897 = vmatprep.subr.mxu0 0.0
      %898 = vmatpush1.msra.mxu0 0.0
      %899 = vmatprep.subr.mxu0 0.0
      %900 = vmatpush1.msra.mxu0 0.0
      %901 = vmatprep.subr.mxu0 0.0
      %902 = vmatpush1.msra.mxu0 0.0
      %903 = vmatprep.subr.mxu0 0.0
      %904 = vmatpush1.msra.mxu0 0.0
      %905 = vmatprep.subr.mxu0 0.0
      %906 = vmatpush1.msra.mxu0 0.0
      %907 = vmatprep.subr.mxu0 0.0
      %908 = vmatpush1.msra.mxu0 0.0
      %909 = vmatprep.subr.mxu0 0.0
      %910 = vmatpush1.msra.mxu0 0.0
      %911 = vmatprep.subr.mxu0 0.0
      %912 = vmatpush1.msra.mxu0 0.0
      %913 = vmatprep.subr.mxu0 0.0
      %914 = vmatpush1.msra.mxu0 0.0
      %915 = vmatprep.subr.mxu0 0.0
      %916 = vmatpush1.msra.mxu0 0.0
      %917 = vmatprep.mubr.f32.mxu0 0.0
      %918 = vmatmul.mubr.f32.gmra.mrb[0].mxu0 %v820
      %v919 = vpop.f32.mrb[0].mxu0
      %v920 = vadd.f32 0.0, %v919
      %v921 = vpop.f32.mrb[0].mxu0
      %922 = vmatprep.mubr.f32.mxu0 0.0
      %923 = vmatmul.mubr.f32.gmra.mrb[0].mxu0 %v821
      %v924 = vpop.f32.mrb[0].mxu0
      %v925 = vadd.f32 0.0, %v924
      %v926 = vpop.f32.mrb[0].mxu0
      %927 = vmatprep.mubr.f32.mxu0 0.0
      %928 = vmatmul.mubr.f32.gmra.mrb[0].mxu0 %v822
      %v929 = vpop.f32.mrb[0].mxu0
      %v930 = vadd.f32 0.0, %v929
      %v931 = vpop.f32.mrb[0].mxu0
      %932 = vmatprep.mubr.f32.mxu0 0.0
      %933 = vmatmul.mubr.f32.gmra.mrb[0].mxu0 %v823
      %v934 = vpop.f32.mrb[0].mxu0
      %v935 = vadd.f32 0.0, %v934
      %v936 = vpop.f32.mrb[0].mxu0
      %937 = vmatprep.mubr.f32.mxu0 0.0
      %938 = vmatmul.mubr.f32.gmra.mrb[0].mxu0 %v824
      %v939 = vpop.f32.mrb[0].mxu0
      %v940 = vadd.f32 0.0, %v939
      %v941 = vpop.f32.mrb[0].mxu0
      %942 = vmatprep.mubr.f32.mxu0 0.0
      %943 = vmatmul.mubr.f32.gmra.mrb[0].mxu0 %v825
      %v944 = vpop.f32.mrb[0].mxu0
      %v945 = vadd.f32 0.0, %v944
      %v946 = vpop.f32.mrb[0].mxu0
      %947 = vmatprep.mubr.f32.mxu0 0.0
      %948 = vmatmul.mubr.f32.gmra.mrb[0].mxu0 %v826
      %v949 = vpop.f32.mrb[0].mxu0
      %v950 = vadd.f32 0.0, %v949
      %v951 = vpop.f32.mrb[0].mxu0
      %952 = vmatprep.mubr.f32.mxu0 0.0
      %953 = vmatmul.mubr.f32.gmra.mrb[0].mxu0 %v827
      %v954 = vpop.f32.mrb[0].mxu0
      %v955 = vadd.f32 0.0, %v954
      %v956 = vpop.f32.mrb[0].mxu0
      %957 = vmatprep.mubr.f32.mxu0 0.0
      %958 = vmatmul.mubr.f32.gmra.mrb[0].mxu0 %v828
      %v959 = vpop.f32.mrb[0].mxu0
      %v960 = vadd.f32 0.0, %v959
      %v961 = vpop.f32.mrb[0].mxu0
      %962 = vmatprep.mubr.f32.mxu0 0.0
      %963 = vmatmul.mubr.f32.gmra.mrb[0].mxu0 %v829
      %v964 = vpop.f32.mrb[0].mxu0
      %v965 = vadd.f32 0.0, %v964
      %v966 = vpop.f32.mrb[0].mxu0
      %967 = vmatprep.mubr.f32.mxu0 0.0
      %968 = vmatmul.mubr.f32.gmra.mrb[0].mxu0 %v830
      %v969 = vpop.f32.mrb[0].mxu0
      %v970 = vadd.f32 0.0, %v969
      %v971 = vpop.f32.mrb[0].mxu0
      %972 = vmatprep.mubr.f32.mxu0 0.0
      %973 = vmatmul.mubr.f32.gmra.mrb[0].mxu0 %v831
      %v974 = vpop.f32.mrb[0].mxu0
      %v975 = vadd.f32 0.0, %v974
      %v976 = vpop.f32.mrb[0].mxu0
      %977 = vmatprep.mubr.f32.mxu0 0.0
      %978 = vmatmul.mubr.f32.gmra.mrb[0].mxu0 %v832
      %v979 = vpop.f32.mrb[0].mxu0
      %v980 = vadd.f32 0.0, %v979
      %v981 = vpop.f32.mrb[0].mxu0
      %982 = vmatprep.mubr.f32.mxu0 0.0
      %983 = vmatmul.mubr.f32.gmra.mrb[0].mxu0 %v833
      %v984 = vpop.f32.mrb[0].mxu0
      %v985 = vadd.f32 0.0, %v984
      %v986 = vpop.f32.mrb[0].mxu0
      %987 = vmatprep.mubr.f32.mxu0 0.0
      %988 = vmatmul.mubr.f32.gmra.mrb[0].mxu0 %v834
      %v989 = vpop.f32.mrb[0].mxu0
      %v990 = vadd.f32 0.0, %v989
      %v991 = vpop.f32.mrb[0].mxu0
      %992 = vmatprep.mubr.f32.mxu0 0.0
      %993 = vmatmul.mubr.f32.gmra.mrb[0].mxu0 %v835
      %v994 = vpop.f32.mrb[0].mxu0
      %v995 = vadd.f32 0.0, %v994
      %v996 = vpop.f32.mrb[0].mxu0
      %997 = vdwg.mxu0
      %v998 = vadd.f32 %v742, %v920
      %v999 = vadd.f32 %v747, %v925
      %v1000 = vadd.f32 %v752, %v930
      %v1001 = vadd.f32 %v757, %v935
      %v1002 = vadd.f32 %v762, %v940
      %v1003 = vadd.f32 %v767, %v945
      %v1004 = vadd.f32 %v772, %v950
      %v1005 = vadd.f32 %v777, %v955
      %v1006 = vadd.f32 %v782, %v960
      %v1007 = vadd.f32 %v787, %v965
      %v1008 = vadd.f32 %v792, %v970
      %v1009 = vadd.f32 %v797, %v975
      %v1010 = vadd.f32 %v802, %v980
      %v1011 = vadd.f32 %v807, %v985
      %v1012 = vadd.f32 %v812, %v990
      %v1013 = vadd.f32 %v817, %v995
      %s1014 = scalar_lea.vmem %s459, 24 [#allocation2]
      %v1015 = vld [vmem:[%s1014] sm:$0xff]
      %v1016 = vld [vmem:[%s1014 + $0x8] sm:$0xff]
      %v1017 = vld [vmem:[%s1014 + $0x18] sm:$0xff]
      %v1018 = vld [vmem:[%s1014 + $0x20] sm:$0xff]
      %v1019 = vld [vmem:[%s1014 + $0x30] sm:$0xff]
      %v1020 = vld [vmem:[%s1014 + $0x38] sm:$0xff]
      %v1021 = vld [vmem:[%s1014 + $0x48] sm:$0xff]
      %v1022 = vld [vmem:[%s1014 + $0x50] sm:$0xff]
      %v1023 = vld [vmem:[%s1014 + $0x60] sm:$0xff]
      %v1024 = vld [vmem:[%s1014 + $0x68] sm:$0xff]
      %v1025 = vld [vmem:[%s1014 + $0x78] sm:$0xff]
      %v1026 = vld [vmem:[%s1014 + $0x80] sm:$0xff]
      %v1027 = vld [vmem:[%s1014 + $0x90] sm:$0xff]
      %v1028 = vld [vmem:[%s1014 + $0x98] sm:$0xff]
      %v1029 = vld [vmem:[%s1014 + $0xa8] sm:$0xff]
      %v1030 = vld [vmem:[%s1014 + $0xb0] sm:$0xff]
      %s1031 = scalar_lea.vmem %s158, 384
      %v1032 = vld [vmem:[%s1031] sm:$0xff]
      %v1033 = vld [vmem:[%s1031 + $0x8] sm:$0xff]
      %v1034 = vld [vmem:[%s1031 + $0x10] sm:$0xff]
      %v1035 = vld [vmem:[%s1031 + $0x18] sm:$0xff]
      %v1036 = vld [vmem:[%s1031 + $0x20] sm:$0xff]
      %v1037 = vld [vmem:[%s1031 + $0x28] sm:$0xff]
      %v1038 = vld [vmem:[%s1031 + $0x30] sm:$0xff]
      %v1039 = vld [vmem:[%s1031 + $0x38] sm:$0xff]
      %v1040 = vld [vmem:[%s1031 + $0x40] sm:$0xff]
      %v1041 = vld [vmem:[%s1031 + $0x48] sm:$0xff]
      %v1042 = vld [vmem:[%s1031 + $0x50] sm:$0xff]
      %v1043 = vld [vmem:[%s1031 + $0x58] sm:$0xff]
      %v1044 = vld [vmem:[%s1031 + $0x60] sm:$0xff]
      %v1045 = vld [vmem:[%s1031 + $0x68] sm:$0xff]
      %v1046 = vld [vmem:[%s1031 + $0x70] sm:$0xff]
      %v1047 = vld [vmem:[%s1031 + $0x78] sm:$0xff]
      %1048 = vmatprep.subr.mxu0 0.0
      %1049 = vmatpush1.msra.mxu0 %v1032
      %1050 = vmatprep.subr.mxu0 0.0
      %1051 = vmatpush1.msra.mxu0 %v1033
      %1052 = vmatprep.subr.mxu0 0.0
      %1053 = vmatpush1.msra.mxu0 %v1034
      %1054 = vmatprep.subr.mxu0 0.0
      %1055 = vmatpush1.msra.mxu0 %v1035
      %1056 = vmatprep.subr.mxu0 0.0
      %1057 = vmatpush1.msra.mxu0 %v1036
      %1058 = vmatprep.subr.mxu0 0.0
      %1059 = vmatpush1.msra.mxu0 %v1037
      %1060 = vmatprep.subr.mxu0 0.0
      %1061 = vmatpush1.msra.mxu0 %v1038
      %1062 = vmatprep.subr.mxu0 0.0
      %1063 = vmatpush1.msra.mxu0 %v1039
      %1064 = vmatprep.subr.mxu0 0.0
      %1065 = vmatpush1.msra.mxu0 %v1040
      %1066 = vmatprep.subr.mxu0 0.0
      %1067 = vmatpush1.msra.mxu0 %v1041
      %1068 = vmatprep.subr.mxu0 0.0
      %1069 = vmatpush1.msra.mxu0 %v1042
      %1070 = vmatprep.subr.mxu0 0.0
      %1071 = vmatpush1.msra.mxu0 %v1043
      %1072 = vmatprep.subr.mxu0 0.0
      %1073 = vmatpush1.msra.mxu0 %v1044
      %1074 = vmatprep.subr.mxu0 0.0
      %1075 = vmatpush1.msra.mxu0 %v1045
      %1076 = vmatprep.subr.mxu0 0.0
      %1077 = vmatpush1.msra.mxu0 %v1046
      %1078 = vmatprep.subr.mxu0 0.0
      %1079 = vmatpush1.msra.mxu0 %v1047
      %1080 = vmatprep.subr.mxu0 0.0
      %1081 = vmatpush1.msra.mxu0 0.0
      %1082 = vmatprep.subr.mxu0 0.0
      %1083 = vmatpush1.msra.mxu0 0.0
      %1084 = vmatprep.subr.mxu0 0.0
      %1085 = vmatpush1.msra.mxu0 0.0
      %1086 = vmatprep.subr.mxu0 0.0
      %1087 = vmatpush1.msra.mxu0 0.0
      %1088 = vmatprep.subr.mxu0 0.0
      %1089 = vmatpush1.msra.mxu0 0.0
      %1090 = vmatprep.subr.mxu0 0.0
      %1091 = vmatpush1.msra.mxu0 0.0
      %1092 = vmatprep.subr.mxu0 0.0
      %1093 = vmatpush1.msra.mxu0 0.0
      %1094 = vmatprep.subr.mxu0 0.0
      %1095 = vmatpush1.msra.mxu0 0.0
      %1096 = vmatprep.subr.mxu0 0.0
      %1097 = vmatpush1.msra.mxu0 0.0
      %1098 = vmatprep.subr.mxu0 0.0
      %1099 = vmatpush1.msra.mxu0 0.0
      %1100 = vmatprep.subr.mxu0 0.0
      %1101 = vmatpush1.msra.mxu0 0.0
      %1102 = vmatprep.subr.mxu0 0.0
      %1103 = vmatpush1.msra.mxu0 0.0
      %1104 = vmatprep.subr.mxu0 0.0
      %1105 = vmatpush1.msra.mxu0 0.0
      %1106 = vmatprep.subr.mxu0 0.0
      %1107 = vmatpush1.msra.mxu0 0.0
      %1108 = vmatprep.subr.mxu0 0.0
      %1109 = vmatpush1.msra.mxu0 0.0
      %1110 = vmatprep.subr.mxu0 0.0
      %1111 = vmatpush1.msra.mxu0 0.0
      %1112 = vmatprep.mubr.f32.mxu0 0.0
      %1113 = vmatmul.mubr.f32.gmra.mrb[0].mxu0 %v1015
      %v1114 = vpop.f32.mrb[0].mxu0
      %v1115 = vadd.f32 0.0, %v1114
      %v1116 = vpop.f32.mrb[0].mxu0
      %1117 = vmatprep.mubr.f32.mxu0 0.0
      %1118 = vmatmul.mubr.f32.gmra.mrb[0].mxu0 %v1016
      %v1119 = vpop.f32.mrb[0].mxu0
      %v1120 = vadd.f32 0.0, %v1119
      %v1121 = vpop.f32.mrb[0].mxu0
      %1122 = vmatprep.mubr.f32.mxu0 0.0
      %1123 = vmatmul.mubr.f32.gmra.mrb[0].mxu0 %v1017
      %v1124 = vpop.f32.mrb[0].mxu0
      %v1125 = vadd.f32 0.0, %v1124
      %v1126 = vpop.f32.mrb[0].mxu0
      %1127 = vmatprep.mubr.f32.mxu0 0.0
      %1128 = vmatmul.mubr.f32.gmra.mrb[0].mxu0 %v1018
      %v1129 = vpop.f32.mrb[0].mxu0
      %v1130 = vadd.f32 0.0, %v1129
      %v1131 = vpop.f32.mrb[0].mxu0
      %1132 = vmatprep.mubr.f32.mxu0 0.0
      %1133 = vmatmul.mubr.f32.gmra.mrb[0].mxu0 %v1019
      %v1134 = vpop.f32.mrb[0].mxu0
      %v1135 = vadd.f32 0.0, %v1134
      %v1136 = vpop.f32.mrb[0].mxu0
      %1137 = vmatprep.mubr.f32.mxu0 0.0
      %1138 = vmatmul.mubr.f32.gmra.mrb[0].mxu0 %v1020
      %v1139 = vpop.f32.mrb[0].mxu0
      %v1140 = vadd.f32 0.0, %v1139
      %v1141 = vpop.f32.mrb[0].mxu0
      %1142 = vmatprep.mubr.f32.mxu0 0.0
      %1143 = vmatmul.mubr.f32.gmra.mrb[0].mxu0 %v1021
      %v1144 = vpop.f32.mrb[0].mxu0
      %v1145 = vadd.f32 0.0, %v1144
      %v1146 = vpop.f32.mrb[0].mxu0
      %1147 = vmatprep.mubr.f32.mxu0 0.0
      %1148 = vmatmul.mubr.f32.gmra.mrb[0].mxu0 %v1022
      %v1149 = vpop.f32.mrb[0].mxu0
      %v1150 = vadd.f32 0.0, %v1149
      %v1151 = vpop.f32.mrb[0].mxu0
      %1152 = vmatprep.mubr.f32.mxu0 0.0
      %1153 = vmatmul.mubr.f32.gmra.mrb[0].mxu0 %v1023
      %v1154 = vpop.f32.mrb[0].mxu0
      %v1155 = vadd.f32 0.0, %v1154
      %v1156 = vpop.f32.mrb[0].mxu0
      %1157 = vmatprep.mubr.f32.mxu0 0.0
      %1158 = vmatmul.mubr.f32.gmra.mrb[0].mxu0 %v1024
      %v1159 = vpop.f32.mrb[0].mxu0
      %v1160 = vadd.f32 0.0, %v1159
      %v1161 = vpop.f32.mrb[0].mxu0
      %1162 = vmatprep.mubr.f32.mxu0 0.0
      %1163 = vmatmul.mubr.f32.gmra.mrb[0].mxu0 %v1025
      %v1164 = vpop.f32.mrb[0].mxu0
      %v1165 = vadd.f32 0.0, %v1164
      %v1166 = vpop.f32.mrb[0].mxu0
      %1167 = vmatprep.mubr.f32.mxu0 0.0
      %1168 = vmatmul.mubr.f32.gmra.mrb[0].mxu0 %v1026
      %v1169 = vpop.f32.mrb[0].mxu0
      %v1170 = vadd.f32 0.0, %v1169
      %v1171 = vpop.f32.mrb[0].mxu0
      %1172 = vmatprep.mubr.f32.mxu0 0.0
      %1173 = vmatmul.mubr.f32.gmra.mrb[0].mxu0 %v1027
      %v1174 = vpop.f32.mrb[0].mxu0
      %v1175 = vadd.f32 0.0, %v1174
      %v1176 = vpop.f32.mrb[0].mxu0
      %1177 = vmatprep.mubr.f32.mxu0 0.0
      %1178 = vmatmul.mubr.f32.gmra.mrb[0].mxu0 %v1028
      %v1179 = vpop.f32.mrb[0].mxu0
      %v1180 = vadd.f32 0.0, %v1179
      %v1181 = vpop.f32.mrb[0].mxu0
      %1182 = vmatprep.mubr.f32.mxu0 0.0
      %1183 = vmatmul.mubr.f32.gmra.mrb[0].mxu0 %v1029
      %v1184 = vpop.f32.mrb[0].mxu0
      %v1185 = vadd.f32 0.0, %v1184
      %v1186 = vpop.f32.mrb[0].mxu0
      %1187 = vmatprep.mubr.f32.mxu0 0.0
      %1188 = vmatmul.mubr.f32.gmra.mrb[0].mxu0 %v1030
      %v1189 = vpop.f32.mrb[0].mxu0
      %v1190 = vadd.f32 0.0, %v1189
      %v1191 = vpop.f32.mrb[0].mxu0
      %1192 = vdwg.mxu0
      %v1193 = vadd.f32 %v998, %v1115
      %v1194 = vadd.f32 %v999, %v1120
      %v1195 = vadd.f32 %v1000, %v1125
      %v1196 = vadd.f32 %v1001, %v1130
      %v1197 = vadd.f32 %v1002, %v1135
      %v1198 = vadd.f32 %v1003, %v1140
      %v1199 = vadd.f32 %v1004, %v1145
      %v1200 = vadd.f32 %v1005, %v1150
      %v1201 = vadd.f32 %v1006, %v1155
      %v1202 = vadd.f32 %v1007, %v1160
      %v1203 = vadd.f32 %v1008, %v1165
      %v1204 = vadd.f32 %v1009, %v1170
      %v1205 = vadd.f32 %v1010, %v1175
      %v1206 = vadd.f32 %v1011, %v1180
      %v1207 = vadd.f32 %v1012, %v1185
      %v1208 = vadd.f32 %v1013, %v1190
      %v1209 = vld [vmem:[%s1014 + $0x1] sm:$0xff]
      %v1210 = vld [vmem:[%s1014 + $0x9] sm:$0xff]
      %v1211 = vld [vmem:[%s1014 + $0x19] sm:$0xff]
      %v1212 = vld [vmem:[%s1014 + $0x21] sm:$0xff]
      %v1213 = vld [vmem:[%s1014 + $0x31] sm:$0xff]
      %v1214 = vld [vmem:[%s1014 + $0x39] sm:$0xff]
      %v1215 = vld [vmem:[%s1014 + $0x49] sm:$0xff]
      %v1216 = vld [vmem:[%s1014 + $0x51] sm:$0xff]
      %v1217 = vld [vmem:[%s1014 + $0x61] sm:$0xff]
      %v1218 = vld [vmem:[%s1014 + $0x69] sm:$0xff]
      %v1219 = vld [vmem:[%s1014 + $0x79] sm:$0xff]
      %v1220 = vld [vmem:[%s1014 + $0x81] sm:$0xff]
      %v1221 = vld [vmem:[%s1014 + $0x91] sm:$0xff]
      %v1222 = vld [vmem:[%s1014 + $0x99] sm:$0xff]
      %v1223 = vld [vmem:[%s1014 + $0xa9] sm:$0xff]
      %v1224 = vld [vmem:[%s1014 + $0xb1] sm:$0xff]
      %s1225 = scalar_lea.vmem %s158, 512
      %v1226 = vld [vmem:[%s1225] sm:$0xff]
      %v1227 = vld [vmem:[%s1225 + $0x8] sm:$0xff]
      %v1228 = vld [vmem:[%s1225 + $0x10] sm:$0xff]
      %v1229 = vld [vmem:[%s1225 + $0x18] sm:$0xff]
      %v1230 = vld [vmem:[%s1225 + $0x20] sm:$0xff]
      %v1231 = vld [vmem:[%s1225 + $0x28] sm:$0xff]
      %v1232 = vld [vmem:[%s1225 + $0x30] sm:$0xff]
      %v1233 = vld [vmem:[%s1225 + $0x38] sm:$0xff]
      %v1234 = vld [vmem:[%s1225 + $0x40] sm:$0xff]
      %v1235 = vld [vmem:[%s1225 + $0x48] sm:$0xff]
      %v1236 = vld [vmem:[%s1225 + $0x50] sm:$0xff]
      %v1237 = vld [vmem:[%s1225 + $0x58] sm:$0xff]
      %v1238 = vld [vmem:[%s1225 + $0x60] sm:$0xff]
      %v1239 = vld [vmem:[%s1225 + $0x68] sm:$0xff]
      %v1240 = vld [vmem:[%s1225 + $0x70] sm:$0xff]
      %v1241 = vld [vmem:[%s1225 + $0x78] sm:$0xff]
      %1242 = vmatprep.subr.mxu0 0.0
      %1243 = vmatpush1.msra.mxu0 %v1226
      %1244 = vmatprep.subr.mxu0 0.0
      %1245 = vmatpush1.msra.mxu0 %v1227
      %1246 = vmatprep.subr.mxu0 0.0
      %1247 = vmatpush1.msra.mxu0 %v1228
      %1248 = vmatprep.subr.mxu0 0.0
      %1249 = vmatpush1.msra.mxu0 %v1229
      %1250 = vmatprep.subr.mxu0 0.0
      %1251 = vmatpush1.msra.mxu0 %v1230
      %1252 = vmatprep.subr.mxu0 0.0
      %1253 = vmatpush1.msra.mxu0 %v1231
      %1254 = vmatprep.subr.mxu0 0.0
      %1255 = vmatpush1.msra.mxu0 %v1232
      %1256 = vmatprep.subr.mxu0 0.0
      %1257 = vmatpush1.msra.mxu0 %v1233
      %1258 = vmatprep.subr.mxu0 0.0
      %1259 = vmatpush1.msra.mxu0 %v1234
      %1260 = vmatprep.subr.mxu0 0.0
      %1261 = vmatpush1.msra.mxu0 %v1235
      %1262 = vmatprep.subr.mxu0 0.0
      %1263 = vmatpush1.msra.mxu0 %v1236
      %1264 = vmatprep.subr.mxu0 0.0
      %1265 = vmatpush1.msra.mxu0 %v1237
      %1266 = vmatprep.subr.mxu0 0.0
      %1267 = vmatpush1.msra.mxu0 %v1238
      %1268 = vmatprep.subr.mxu0 0.0
      %1269 = vmatpush1.msra.mxu0 %v1239
      %1270 = vmatprep.subr.mxu0 0.0
      %1271 = vmatpush1.msra.mxu0 %v1240
      %1272 = vmatprep.subr.mxu0 0.0
      %1273 = vmatpush1.msra.mxu0 %v1241
      %1274 = vmatprep.subr.mxu0 0.0
      %1275 = vmatpush1.msra.mxu0 0.0
      %1276 = vmatprep.subr.mxu0 0.0
      %1277 = vmatpush1.msra.mxu0 0.0
      %1278 = vmatprep.subr.mxu0 0.0
      %1279 = vmatpush1.msra.mxu0 0.0
      %1280 = vmatprep.subr.mxu0 0.0
      %1281 = vmatpush1.msra.mxu0 0.0
      %1282 = vmatprep.subr.mxu0 0.0
      %1283 = vmatpush1.msra.mxu0 0.0
      %1284 = vmatprep.subr.mxu0 0.0
      %1285 = vmatpush1.msra.mxu0 0.0
      %1286 = vmatprep.subr.mxu0 0.0
      %1287 = vmatpush1.msra.mxu0 0.0
      %1288 = vmatprep.subr.mxu0 0.0
      %1289 = vmatpush1.msra.mxu0 0.0
      %1290 = vmatprep.subr.mxu0 0.0
      %1291 = vmatpush1.msra.mxu0 0.0
      %1292 = vmatprep.subr.mxu0 0.0
      %1293 = vmatpush1.msra.mxu0 0.0
      %1294 = vmatprep.subr.mxu0 0.0
      %1295 = vmatpush1.msra.mxu0 0.0
      %1296 = vmatprep.subr.mxu0 0.0
      %1297 = vmatpush1.msra.mxu0 0.0
      %1298 = vmatprep.subr.mxu0 0.0
      %1299 = vmatpush1.msra.mxu0 0.0
      %1300 = vmatprep.subr.mxu0 0.0
      %1301 = vmatpush1.msra.mxu0 0.0
      %1302 = vmatprep.subr.mxu0 0.0
      %1303 = vmatpush1.msra.mxu0 0.0
      %1304 = vmatprep.subr.mxu0 0.0
      %1305 = vmatpush1.msra.mxu0 0.0
      %1306 = vmatprep.mubr.f32.mxu0 0.0
      %1307 = vmatmul.mubr.f32.gmra.mrb[0].mxu0 %v1209
      %v1308 = vpop.f32.mrb[0].mxu0
      %v1309 = vadd.f32 0.0, %v1308
      %v1310 = vpop.f32.mrb[0].mxu0
      %1311 = vmatprep.mubr.f32.mxu0 0.0
      %1312 = vmatmul.mubr.f32.gmra.mrb[0].mxu0 %v1210
      %v1313 = vpop.f32.mrb[0].mxu0
      %v1314 = vadd.f32 0.0, %v1313
      %v1315 = vpop.f32.mrb[0].mxu0
      %1316 = vmatprep.mubr.f32.mxu0 0.0
      %1317 = vmatmul.mubr.f32.gmra.mrb[0].mxu0 %v1211
      %v1318 = vpop.f32.mrb[0].mxu0
      %v1319 = vadd.f32 0.0, %v1318
      %v1320 = vpop.f32.mrb[0].mxu0
      %1321 = vmatprep.mubr.f32.mxu0 0.0
      %1322 = vmatmul.mubr.f32.gmra.mrb[0].mxu0 %v1212
      %v1323 = vpop.f32.mrb[0].mxu0
      %v1324 = vadd.f32 0.0, %v1323
      %v1325 = vpop.f32.mrb[0].mxu0
      %1326 = vmatprep.mubr.f32.mxu0 0.0
      %1327 = vmatmul.mubr.f32.gmra.mrb[0].mxu0 %v1213
      %v1328 = vpop.f32.mrb[0].mxu0
      %v1329 = vadd.f32 0.0, %v1328
      %v1330 = vpop.f32.mrb[0].mxu0
      %1331 = vmatprep.mubr.f32.mxu0 0.0
      %1332 = vmatmul.mubr.f32.gmra.mrb[0].mxu0 %v1214
      %v1333 = vpop.f32.mrb[0].mxu0
      %v1334 = vadd.f32 0.0, %v1333
      %v1335 = vpop.f32.mrb[0].mxu0
      %1336 = vmatprep.mubr.f32.mxu0 0.0
      %1337 = vmatmul.mubr.f32.gmra.mrb[0].mxu0 %v1215
      %v1338 = vpop.f32.mrb[0].mxu0
      %v1339 = vadd.f32 0.0, %v1338
      %v1340 = vpop.f32.mrb[0].mxu0
      %1341 = vmatprep.mubr.f32.mxu0 0.0
      %1342 = vmatmul.mubr.f32.gmra.mrb[0].mxu0 %v1216
      %v1343 = vpop.f32.mrb[0].mxu0
      %v1344 = vadd.f32 0.0, %v1343
      %v1345 = vpop.f32.mrb[0].mxu0
      %1346 = vmatprep.mubr.f32.mxu0 0.0
      %1347 = vmatmul.mubr.f32.gmra.mrb[0].mxu0 %v1217
      %v1348 = vpop.f32.mrb[0].mxu0
      %v1349 = vadd.f32 0.0, %v1348
      %v1350 = vpop.f32.mrb[0].mxu0
      %1351 = vmatprep.mubr.f32.mxu0 0.0
      %1352 = vmatmul.mubr.f32.gmra.mrb[0].mxu0 %v1218
      %v1353 = vpop.f32.mrb[0].mxu0
      %v1354 = vadd.f32 0.0, %v1353
      %v1355 = vpop.f32.mrb[0].mxu0
      %1356 = vmatprep.mubr.f32.mxu0 0.0
      %1357 = vmatmul.mubr.f32.gmra.mrb[0].mxu0 %v1219
      %v1358 = vpop.f32.mrb[0].mxu0
      %v1359 = vadd.f32 0.0, %v1358
      %v1360 = vpop.f32.mrb[0].mxu0
      %1361 = vmatprep.mubr.f32.mxu0 0.0
      %1362 = vmatmul.mubr.f32.gmra.mrb[0].mxu0 %v1220
      %v1363 = vpop.f32.mrb[0].mxu0
      %v1364 = vadd.f32 0.0, %v1363
      %v1365 = vpop.f32.mrb[0].mxu0
      %1366 = vmatprep.mubr.f32.mxu0 0.0
      %1367 = vmatmul.mubr.f32.gmra.mrb[0].mxu0 %v1221
      %v1368 = vpop.f32.mrb[0].mxu0
      %v1369 = vadd.f32 0.0, %v1368
      %v1370 = vpop.f32.mrb[0].mxu0
      %1371 = vmatprep.mubr.f32.mxu0 0.0
      %1372 = vmatmul.mubr.f32.gmra.mrb[0].mxu0 %v1222
      %v1373 = vpop.f32.mrb[0].mxu0
      %v1374 = vadd.f32 0.0, %v1373
      %v1375 = vpop.f32.mrb[0].mxu0
      %1376 = vmatprep.mubr.f32.mxu0 0.0
      %1377 = vmatmul.mubr.f32.gmra.mrb[0].mxu0 %v1223
      %v1378 = vpop.f32.mrb[0].mxu0
      %v1379 = vadd.f32 0.0, %v1378
      %v1380 = vpop.f32.mrb[0].mxu0
      %1381 = vmatprep.mubr.f32.mxu0 0.0
      %1382 = vmatmul.mubr.f32.gmra.mrb[0].mxu0 %v1224
      %v1383 = vpop.f32.mrb[0].mxu0
      %v1384 = vadd.f32 0.0, %v1383
      %v1385 = vpop.f32.mrb[0].mxu0
      %1386 = vdwg.mxu0
      %v1387 = vadd.f32 %v1193, %v1309
      %v1388 = vadd.f32 %v1194, %v1314
      %v1389 = vadd.f32 %v1195, %v1319
      %v1390 = vadd.f32 %v1196, %v1324
      %v1391 = vadd.f32 %v1197, %v1329
      %v1392 = vadd.f32 %v1198, %v1334
      %v1393 = vadd.f32 %v1199, %v1339
      %v1394 = vadd.f32 %v1200, %v1344
      %v1395 = vadd.f32 %v1201, %v1349
      %v1396 = vadd.f32 %v1202, %v1354
      %v1397 = vadd.f32 %v1203, %v1359
      %v1398 = vadd.f32 %v1204, %v1364
      %v1399 = vadd.f32 %v1205, %v1369
      %v1400 = vadd.f32 %v1206, %v1374
      %v1401 = vadd.f32 %v1207, %v1379
      %v1402 = vadd.f32 %v1208, %v1384
      %v1403 = vld [vmem:[%s1014 + $0x2] sm:$0xff]
      %v1404 = vld [vmem:[%s1014 + $0xa] sm:$0xff]
      %v1405 = vld [vmem:[%s1014 + $0x1a] sm:$0xff]
      %v1406 = vld [vmem:[%s1014 + $0x22] sm:$0xff]
      %v1407 = vld [vmem:[%s1014 + $0x32] sm:$0xff]
      %v1408 = vld [vmem:[%s1014 + $0x3a] sm:$0xff]
      %v1409 = vld [vmem:[%s1014 + $0x4a] sm:$0xff]
      %v1410 = vld [vmem:[%s1014 + $0x52] sm:$0xff]
      %v1411 = vld [vmem:[%s1014 + $0x62] sm:$0xff]
      %v1412 = vld [vmem:[%s1014 + $0x6a] sm:$0xff]
      %v1413 = vld [vmem:[%s1014 + $0x7a] sm:$0xff]
      %v1414 = vld [vmem:[%s1014 + $0x82] sm:$0xff]
      %v1415 = vld [vmem:[%s1014 + $0x92] sm:$0xff]
      %v1416 = vld [vmem:[%s1014 + $0x9a] sm:$0xff]
      %v1417 = vld [vmem:[%s1014 + $0xaa] sm:$0xff]
      %v1418 = vld [vmem:[%s1014 + $0xb2] sm:$0xff]
      %s1419 = scalar_lea.vmem %s158, 640
      %v1420 = vld [vmem:[%s1419] sm:$0xff]
      %v1421 = vld [vmem:[%s1419 + $0x8] sm:$0xff]
      %v1422 = vld [vmem:[%s1419 + $0x10] sm:$0xff]
      %v1423 = vld [vmem:[%s1419 + $0x18] sm:$0xff]
      %v1424 = vld [vmem:[%s1419 + $0x20] sm:$0xff]
      %v1425 = vld [vmem:[%s1419 + $0x28] sm:$0xff]
      %v1426 = vld [vmem:[%s1419 + $0x30] sm:$0xff]
      %v1427 = vld [vmem:[%s1419 + $0x38] sm:$0xff]
      %v1428 = vld [vmem:[%s1419 + $0x40] sm:$0xff]
      %v1429 = vld [vmem:[%s1419 + $0x48] sm:$0xff]
      %v1430 = vld [vmem:[%s1419 + $0x50] sm:$0xff]
      %v1431 = vld [vmem:[%s1419 + $0x58] sm:$0xff]
      %v1432 = vld [vmem:[%s1419 + $0x60] sm:$0xff]
      %v1433 = vld [vmem:[%s1419 + $0x68] sm:$0xff]
      %v1434 = vld [vmem:[%s1419 + $0x70] sm:$0xff]
      %v1435 = vld [vmem:[%s1419 + $0x78] sm:$0xff]
      %1436 = vmatprep.subr.mxu0 0.0
      %1437 = vmatpush1.msra.mxu0 %v1420
      %1438 = vmatprep.subr.mxu0 0.0
      %1439 = vmatpush1.msra.mxu0 %v1421
      %1440 = vmatprep.subr.mxu0 0.0
      %1441 = vmatpush1.msra.mxu0 %v1422
      %1442 = vmatprep.subr.mxu0 0.0
      %1443 = vmatpush1.msra.mxu0 %v1423
      %1444 = vmatprep.subr.mxu0 0.0
      %1445 = vmatpush1.msra.mxu0 %v1424
      %1446 = vmatprep.subr.mxu0 0.0
      %1447 = vmatpush1.msra.mxu0 %v1425
      %1448 = vmatprep.subr.mxu0 0.0
      %1449 = vmatpush1.msra.mxu0 %v1426
      %1450 = vmatprep.subr.mxu0 0.0
      %1451 = vmatpush1.msra.mxu0 %v1427
      %1452 = vmatprep.subr.mxu0 0.0
      %1453 = vmatpush1.msra.mxu0 %v1428
      %1454 = vmatprep.subr.mxu0 0.0
      %1455 = vmatpush1.msra.mxu0 %v1429
      %1456 = vmatprep.subr.mxu0 0.0
      %1457 = vmatpush1.msra.mxu0 %v1430
      %1458 = vmatprep.subr.mxu0 0.0
      %1459 = vmatpush1.msra.mxu0 %v1431
      %1460 = vmatprep.subr.mxu0 0.0
      %1461 = vmatpush1.msra.mxu0 %v1432
      %1462 = vmatprep.subr.mxu0 0.0
      %1463 = vmatpush1.msra.mxu0 %v1433
      %1464 = vmatprep.subr.mxu0 0.0
      %1465 = vmatpush1.msra.mxu0 %v1434
      %1466 = vmatprep.subr.mxu0 0.0
      %1467 = vmatpush1.msra.mxu0 %v1435
      %1468 = vmatprep.subr.mxu0 0.0
      %1469 = vmatpush1.msra.mxu0 0.0
      %1470 = vmatprep.subr.mxu0 0.0
      %1471 = vmatpush1.msra.mxu0 0.0
      %1472 = vmatprep.subr.mxu0 0.0
      %1473 = vmatpush1.msra.mxu0 0.0
      %1474 = vmatprep.subr.mxu0 0.0
      %1475 = vmatpush1.msra.mxu0 0.0
      %1476 = vmatprep.subr.mxu0 0.0
      %1477 = vmatpush1.msra.mxu0 0.0
      %1478 = vmatprep.subr.mxu0 0.0
      %1479 = vmatpush1.msra.mxu0 0.0
      %1480 = vmatprep.subr.mxu0 0.0
      %1481 = vmatpush1.msra.mxu0 0.0
      %1482 = vmatprep.subr.mxu0 0.0
      %1483 = vmatpush1.msra.mxu0 0.0
      %1484 = vmatprep.subr.mxu0 0.0
      %1485 = vmatpush1.msra.mxu0 0.0
      %1486 = vmatprep.subr.mxu0 0.0
      %1487 = vmatpush1.msra.mxu0 0.0
      %1488 = vmatprep.subr.mxu0 0.0
      %1489 = vmatpush1.msra.mxu0 0.0
      %1490 = vmatprep.subr.mxu0 0.0
      %1491 = vmatpush1.msra.mxu0 0.0
      %1492 = vmatprep.subr.mxu0 0.0
      %1493 = vmatpush1.msra.mxu0 0.0
      %1494 = vmatprep.subr.mxu0 0.0
      %1495 = vmatpush1.msra.mxu0 0.0
      %1496 = vmatprep.subr.mxu0 0.0
      %1497 = vmatpush1.msra.mxu0 0.0
      %1498 = vmatprep.subr.mxu0 0.0
      %1499 = vmatpush1.msra.mxu0 0.0
      %1500 = vmatprep.mubr.f32.mxu0 0.0
      %1501 = vmatmul.mubr.f32.gmra.mrb[0].mxu0 %v1403
      %v1502 = vpop.f32.mrb[0].mxu0
      %v1503 = vadd.f32 0.0, %v1502
      %v1504 = vpop.f32.mrb[0].mxu0
      %1505 = vmatprep.mubr.f32.mxu0 0.0
      %1506 = vmatmul.mubr.f32.gmra.mrb[0].mxu0 %v1404
      %v1507 = vpop.f32.mrb[0].mxu0
      %v1508 = vadd.f32 0.0, %v1507
      %v1509 = vpop.f32.mrb[0].mxu0
      %1510 = vmatprep.mubr.f32.mxu0 0.0
      %1511 = vmatmul.mubr.f32.gmra.mrb[0].mxu0 %v1405
      %v1512 = vpop.f32.mrb[0].mxu0
      %v1513 = vadd.f32 0.0, %v1512
      %v1514 = vpop.f32.mrb[0].mxu0
      %1515 = vmatprep.mubr.f32.mxu0 0.0
      %1516 = vmatmul.mubr.f32.gmra.mrb[0].mxu0 %v1406
      %v1517 = vpop.f32.mrb[0].mxu0
      %v1518 = vadd.f32 0.0, %v1517
      %v1519 = vpop.f32.mrb[0].mxu0
      %1520 = vmatprep.mubr.f32.mxu0 0.0
      %1521 = vmatmul.mubr.f32.gmra.mrb[0].mxu0 %v1407
      %v1522 = vpop.f32.mrb[0].mxu0
      %v1523 = vadd.f32 0.0, %v1522
      %v1524 = vpop.f32.mrb[0].mxu0
      %1525 = vmatprep.mubr.f32.mxu0 0.0
      %1526 = vmatmul.mubr.f32.gmra.mrb[0].mxu0 %v1408
      %v1527 = vpop.f32.mrb[0].mxu0
      %v1528 = vadd.f32 0.0, %v1527
      %v1529 = vpop.f32.mrb[0].mxu0
      %1530 = vmatprep.mubr.f32.mxu0 0.0
      %1531 = vmatmul.mubr.f32.gmra.mrb[0].mxu0 %v1409
      %v1532 = vpop.f32.mrb[0].mxu0
      %v1533 = vadd.f32 0.0, %v1532
      %v1534 = vpop.f32.mrb[0].mxu0
      %1535 = vmatprep.mubr.f32.mxu0 0.0
      %1536 = vmatmul.mubr.f32.gmra.mrb[0].mxu0 %v1410
      %v1537 = vpop.f32.mrb[0].mxu0
      %v1538 = vadd.f32 0.0, %v1537
      %v1539 = vpop.f32.mrb[0].mxu0
      %1540 = vmatprep.mubr.f32.mxu0 0.0
      %1541 = vmatmul.mubr.f32.gmra.mrb[0].mxu0 %v1411
      %v1542 = vpop.f32.mrb[0].mxu0
      %v1543 = vadd.f32 0.0, %v1542
      %v1544 = vpop.f32.mrb[0].mxu0
      %1545 = vmatprep.mubr.f32.mxu0 0.0
      %1546 = vmatmul.mubr.f32.gmra.mrb[0].mxu0 %v1412
      %v1547 = vpop.f32.mrb[0].mxu0
      %v1548 = vadd.f32 0.0, %v1547
      %v1549 = vpop.f32.mrb[0].mxu0
      %1550 = vmatprep.mubr.f32.mxu0 0.0
      %1551 = vmatmul.mubr.f32.gmra.mrb[0].mxu0 %v1413
      %v1552 = vpop.f32.mrb[0].mxu0
      %v1553 = vadd.f32 0.0, %v1552
      %v1554 = vpop.f32.mrb[0].mxu0
      %1555 = vmatprep.mubr.f32.mxu0 0.0
      %1556 = vmatmul.mubr.f32.gmra.mrb[0].mxu0 %v1414
      %v1557 = vpop.f32.mrb[0].mxu0
      %v1558 = vadd.f32 0.0, %v1557
      %v1559 = vpop.f32.mrb[0].mxu0
      %1560 = vmatprep.mubr.f32.mxu0 0.0
      %1561 = vmatmul.mubr.f32.gmra.mrb[0].mxu0 %v1415
      %v1562 = vpop.f32.mrb[0].mxu0
      %v1563 = vadd.f32 0.0, %v1562
      %v1564 = vpop.f32.mrb[0].mxu0
      %1565 = vmatprep.mubr.f32.mxu0 0.0
      %1566 = vmatmul.mubr.f32.gmra.mrb[0].mxu0 %v1416
      %v1567 = vpop.f32.mrb[0].mxu0
      %v1568 = vadd.f32 0.0, %v1567
      %v1569 = vpop.f32.mrb[0].mxu0
      %1570 = vmatprep.mubr.f32.mxu0 0.0
      %1571 = vmatmul.mubr.f32.gmra.mrb[0].mxu0 %v1417
      %v1572 = vpop.f32.mrb[0].mxu0
      %v1573 = vadd.f32 0.0, %v1572
      %v1574 = vpop.f32.mrb[0].mxu0
      %1575 = vmatprep.mubr.f32.mxu0 0.0
      %1576 = vmatmul.mubr.f32.gmra.mrb[0].mxu0 %v1418
      %v1577 = vpop.f32.mrb[0].mxu0
      %v1578 = vadd.f32 0.0, %v1577
      %v1579 = vpop.f32.mrb[0].mxu0
      %1580 = vdwg.mxu0
      %v1581 = vadd.f32 %v1387, %v1503
      %v1582 = vadd.f32 %v1388, %v1508
      %v1583 = vadd.f32 %v1389, %v1513
      %v1584 = vadd.f32 %v1390, %v1518
      %v1585 = vadd.f32 %v1391, %v1523
      %v1586 = vadd.f32 %v1392, %v1528
      %v1587 = vadd.f32 %v1393, %v1533
      %v1588 = vadd.f32 %v1394, %v1538
      %v1589 = vadd.f32 %v1395, %v1543
      %v1590 = vadd.f32 %v1396, %v1548
      %v1591 = vadd.f32 %v1397, %v1553
      %v1592 = vadd.f32 %v1398, %v1558
      %v1593 = vadd.f32 %v1399, %v1563
      %v1594 = vadd.f32 %v1400, %v1568
      %v1595 = vadd.f32 %v1401, %v1573
      %v1596 = vadd.f32 %v1402, %v1578
      %s1597 = scalar_lea.vmem %s459, 48 [#allocation2]
      %v1598 = vld [vmem:[%s1597] sm:$0xff]
      %v1599 = vld [vmem:[%s1597 + $0x8] sm:$0xff]
      %v1600 = vld [vmem:[%s1597 + $0x18] sm:$0xff]
      %v1601 = vld [vmem:[%s1597 + $0x20] sm:$0xff]
      %v1602 = vld [vmem:[%s1597 + $0x30] sm:$0xff]
      %v1603 = vld [vmem:[%s1597 + $0x38] sm:$0xff]
      %v1604 = vld [vmem:[%s1597 + $0x48] sm:$0xff]
      %v1605 = vld [vmem:[%s1597 + $0x50] sm:$0xff]
      %v1606 = vld [vmem:[%s1597 + $0x60] sm:$0xff]
      %v1607 = vld [vmem:[%s1597 + $0x68] sm:$0xff]
      %v1608 = vld [vmem:[%s1597 + $0x78] sm:$0xff]
      %v1609 = vld [vmem:[%s1597 + $0x80] sm:$0xff]
      %v1610 = vld [vmem:[%s1597 + $0x90] sm:$0xff]
      %v1611 = vld [vmem:[%s1597 + $0x98] sm:$0xff]
      %v1612 = vld [vmem:[%s1597 + $0xa8] sm:$0xff]
      %v1613 = vld [vmem:[%s1597 + $0xb0] sm:$0xff]
      %s1614 = scalar_lea.vmem %s158, 768
      %v1615 = vld [vmem:[%s1614] sm:$0xff]
      %v1616 = vld [vmem:[%s1614 + $0x8] sm:$0xff]
      %v1617 = vld [vmem:[%s1614 + $0x10] sm:$0xff]
      %v1618 = vld [vmem:[%s1614 + $0x18] sm:$0xff]
      %v1619 = vld [vmem:[%s1614 + $0x20] sm:$0xff]
      %v1620 = vld [vmem:[%s1614 + $0x28] sm:$0xff]
      %v1621 = vld [vmem:[%s1614 + $0x30] sm:$0xff]
      %v1622 = vld [vmem:[%s1614 + $0x38] sm:$0xff]
      %v1623 = vld [vmem:[%s1614 + $0x40] sm:$0xff]
      %v1624 = vld [vmem:[%s1614 + $0x48] sm:$0xff]
      %v1625 = vld [vmem:[%s1614 + $0x50] sm:$0xff]
      %v1626 = vld [vmem:[%s1614 + $0x58] sm:$0xff]
      %v1627 = vld [vmem:[%s1614 + $0x60] sm:$0xff]
      %v1628 = vld [vmem:[%s1614 + $0x68] sm:$0xff]
      %v1629 = vld [vmem:[%s1614 + $0x70] sm:$0xff]
      %v1630 = vld [vmem:[%s1614 + $0x78] sm:$0xff]
      %1631 = vmatprep.subr.mxu0 0.0
      %1632 = vmatpush1.msra.mxu0 %v1615
      %1633 = vmatprep.subr.mxu0 0.0
      %1634 = vmatpush1.msra.mxu0 %v1616
      %1635 = vmatprep.subr.mxu0 0.0
      %1636 = vmatpush1.msra.mxu0 %v1617
      %1637 = vmatprep.subr.mxu0 0.0
      %1638 = vmatpush1.msra.mxu0 %v1618
      %1639 = vmatprep.subr.mxu0 0.0
      %1640 = vmatpush1.msra.mxu0 %v1619
      %1641 = vmatprep.subr.mxu0 0.0
      %1642 = vmatpush1.msra.mxu0 %v1620
      %1643 = vmatprep.subr.mxu0 0.0
      %1644 = vmatpush1.msra.mxu0 %v1621
      %1645 = vmatprep.subr.mxu0 0.0
      %1646 = vmatpush1.msra.mxu0 %v1622
      %1647 = vmatprep.subr.mxu0 0.0
      %1648 = vmatpush1.msra.mxu0 %v1623
      %1649 = vmatprep.subr.mxu0 0.0
      %1650 = vmatpush1.msra.mxu0 %v1624
      %1651 = vmatprep.subr.mxu0 0.0
      %1652 = vmatpush1.msra.mxu0 %v1625
      %1653 = vmatprep.subr.mxu0 0.0
      %1654 = vmatpush1.msra.mxu0 %v1626
      %1655 = vmatprep.subr.mxu0 0.0
      %1656 = vmatpush1.msra.mxu0 %v1627
      %1657 = vmatprep.subr.mxu0 0.0
      %1658 = vmatpush1.msra.mxu0 %v1628
      %1659 = vmatprep.subr.mxu0 0.0
      %1660 = vmatpush1.msra.mxu0 %v1629
      %1661 = vmatprep.subr.mxu0 0.0
      %1662 = vmatpush1.msra.mxu0 %v1630
      %1663 = vmatprep.subr.mxu0 0.0
      %1664 = vmatpush1.msra.mxu0 0.0
      %1665 = vmatprep.subr.mxu0 0.0
      %1666 = vmatpush1.msra.mxu0 0.0
      %1667 = vmatprep.subr.mxu0 0.0
      %1668 = vmatpush1.msra.mxu0 0.0
      %1669 = vmatprep.subr.mxu0 0.0
      %1670 = vmatpush1.msra.mxu0 0.0
      %1671 = vmatprep.subr.mxu0 0.0
      %1672 = vmatpush1.msra.mxu0 0.0
      %1673 = vmatprep.subr.mxu0 0.0
      %1674 = vmatpush1.msra.mxu0 0.0
      %1675 = vmatprep.subr.mxu0 0.0
      %1676 = vmatpush1.msra.mxu0 0.0
      %1677 = vmatprep.subr.mxu0 0.0
      %1678 = vmatpush1.msra.mxu0 0.0
      %1679 = vmatprep.subr.mxu0 0.0
      %1680 = vmatpush1.msra.mxu0 0.0
      %1681 = vmatprep.subr.mxu0 0.0
      %1682 = vmatpush1.msra.mxu0 0.0
      %1683 = vmatprep.subr.mxu0 0.0
      %1684 = vmatpush1.msra.mxu0 0.0
      %1685 = vmatprep.subr.mxu0 0.0
      %1686 = vmatpush1.msra.mxu0 0.0
      %1687 = vmatprep.subr.mxu0 0.0
      %1688 = vmatpush1.msra.mxu0 0.0
      %1689 = vmatprep.subr.mxu0 0.0
      %1690 = vmatpush1.msra.mxu0 0.0
      %1691 = vmatprep.subr.mxu0 0.0
      %1692 = vmatpush1.msra.mxu0 0.0
      %1693 = vmatprep.subr.mxu0 0.0
      %1694 = vmatpush1.msra.mxu0 0.0
      %1695 = vmatprep.mubr.f32.mxu0 0.0
      %1696 = vmatmul.mubr.f32.gmra.mrb[0].mxu0 %v1598
      %v1697 = vpop.f32.mrb[0].mxu0
      %v1698 = vadd.f32 0.0, %v1697
      %v1699 = vpop.f32.mrb[0].mxu0
      %1700 = vmatprep.mubr.f32.mxu0 0.0
      %1701 = vmatmul.mubr.f32.gmra.mrb[0].mxu0 %v1599
      %v1702 = vpop.f32.mrb[0].mxu0
      %v1703 = vadd.f32 0.0, %v1702
      %v1704 = vpop.f32.mrb[0].mxu0
      %1705 = vmatprep.mubr.f32.mxu0 0.0
      %1706 = vmatmul.mubr.f32.gmra.mrb[0].mxu0 %v1600
      %v1707 = vpop.f32.mrb[0].mxu0
      %v1708 = vadd.f32 0.0, %v1707
      %v1709 = vpop.f32.mrb[0].mxu0
      %1710 = vmatprep.mubr.f32.mxu0 0.0
      %1711 = vmatmul.mubr.f32.gmra.mrb[0].mxu0 %v1601
      %v1712 = vpop.f32.mrb[0].mxu0
      %v1713 = vadd.f32 0.0, %v1712
      %v1714 = vpop.f32.mrb[0].mxu0
      %1715 = vmatprep.mubr.f32.mxu0 0.0
      %1716 = vmatmul.mubr.f32.gmra.mrb[0].mxu0 %v1602
      %v1717 = vpop.f32.mrb[0].mxu0
      %v1718 = vadd.f32 0.0, %v1717
      %v1719 = vpop.f32.mrb[0].mxu0
      %1720 = vmatprep.mubr.f32.mxu0 0.0
      %1721 = vmatmul.mubr.f32.gmra.mrb[0].mxu0 %v1603
      %v1722 = vpop.f32.mrb[0].mxu0
      %v1723 = vadd.f32 0.0, %v1722
      %v1724 = vpop.f32.mrb[0].mxu0
      %1725 = vmatprep.mubr.f32.mxu0 0.0
      %1726 = vmatmul.mubr.f32.gmra.mrb[0].mxu0 %v1604
      %v1727 = vpop.f32.mrb[0].mxu0
      %v1728 = vadd.f32 0.0, %v1727
      %v1729 = vpop.f32.mrb[0].mxu0
      %1730 = vmatprep.mubr.f32.mxu0 0.0
      %1731 = vmatmul.mubr.f32.gmra.mrb[0].mxu0 %v1605
      %v1732 = vpop.f32.mrb[0].mxu0
      %v1733 = vadd.f32 0.0, %v1732
      %v1734 = vpop.f32.mrb[0].mxu0
      %1735 = vmatprep.mubr.f32.mxu0 0.0
      %1736 = vmatmul.mubr.f32.gmra.mrb[0].mxu0 %v1606
      %v1737 = vpop.f32.mrb[0].mxu0
      %v1738 = vadd.f32 0.0, %v1737
      %v1739 = vpop.f32.mrb[0].mxu0
      %1740 = vmatprep.mubr.f32.mxu0 0.0
      %1741 = vmatmul.mubr.f32.gmra.mrb[0].mxu0 %v1607
      %v1742 = vpop.f32.mrb[0].mxu0
      %v1743 = vadd.f32 0.0, %v1742
      %v1744 = vpop.f32.mrb[0].mxu0
      %1745 = vmatprep.mubr.f32.mxu0 0.0
      %1746 = vmatmul.mubr.f32.gmra.mrb[0].mxu0 %v1608
      %v1747 = vpop.f32.mrb[0].mxu0
      %v1748 = vadd.f32 0.0, %v1747
      %v1749 = vpop.f32.mrb[0].mxu0
      %1750 = vmatprep.mubr.f32.mxu0 0.0
      %1751 = vmatmul.mubr.f32.gmra.mrb[0].mxu0 %v1609
      %v1752 = vpop.f32.mrb[0].mxu0
      %v1753 = vadd.f32 0.0, %v1752
      %v1754 = vpop.f32.mrb[0].mxu0
      %1755 = vmatprep.mubr.f32.mxu0 0.0
      %1756 = vmatmul.mubr.f32.gmra.mrb[0].mxu0 %v1610
      %v1757 = vpop.f32.mrb[0].mxu0
      %v1758 = vadd.f32 0.0, %v1757
      %v1759 = vpop.f32.mrb[0].mxu0
      %1760 = vmatprep.mubr.f32.mxu0 0.0
      %1761 = vmatmul.mubr.f32.gmra.mrb[0].mxu0 %v1611
      %v1762 = vpop.f32.mrb[0].mxu0
      %v1763 = vadd.f32 0.0, %v1762
      %v1764 = vpop.f32.mrb[0].mxu0
      %1765 = vmatprep.mubr.f32.mxu0 0.0
      %1766 = vmatmul.mubr.f32.gmra.mrb[0].mxu0 %v1612
      %v1767 = vpop.f32.mrb[0].mxu0
      %v1768 = vadd.f32 0.0, %v1767
      %v1769 = vpop.f32.mrb[0].mxu0
      %1770 = vmatprep.mubr.f32.mxu0 0.0
      %1771 = vmatmul.mubr.f32.gmra.mrb[0].mxu0 %v1613
      %v1772 = vpop.f32.mrb[0].mxu0
      %v1773 = vadd.f32 0.0, %v1772
      %v1774 = vpop.f32.mrb[0].mxu0
      %1775 = vdwg.mxu0
      %v1776 = vadd.f32 %v1581, %v1698
      %v1777 = vadd.f32 %v1582, %v1703
      %v1778 = vadd.f32 %v1583, %v1708
      %v1779 = vadd.f32 %v1584, %v1713
      %v1780 = vadd.f32 %v1585, %v1718
      %v1781 = vadd.f32 %v1586, %v1723
      %v1782 = vadd.f32 %v1587, %v1728
      %v1783 = vadd.f32 %v1588, %v1733
      %v1784 = vadd.f32 %v1589, %v1738
      %v1785 = vadd.f32 %v1590, %v1743
      %v1786 = vadd.f32 %v1591, %v1748
      %v1787 = vadd.f32 %v1592, %v1753
      %v1788 = vadd.f32 %v1593, %v1758
      %v1789 = vadd.f32 %v1594, %v1763
      %v1790 = vadd.f32 %v1595, %v1768
      %v1791 = vadd.f32 %v1596, %v1773
      %v1792 = vld [vmem:[%s1597 + $0x1] sm:$0xff]
      %v1793 = vld [vmem:[%s1597 + $0x9] sm:$0xff]
      %v1794 = vld [vmem:[%s1597 + $0x19] sm:$0xff]
      %v1795 = vld [vmem:[%s1597 + $0x21] sm:$0xff]
      %v1796 = vld [vmem:[%s1597 + $0x31] sm:$0xff]
      %v1797 = vld [vmem:[%s1597 + $0x39] sm:$0xff]
      %v1798 = vld [vmem:[%s1597 + $0x49] sm:$0xff]
      %v1799 = vld [vmem:[%s1597 + $0x51] sm:$0xff]
      %v1800 = vld [vmem:[%s1597 + $0x61] sm:$0xff]
      %v1801 = vld [vmem:[%s1597 + $0x69] sm:$0xff]
      %v1802 = vld [vmem:[%s1597 + $0x79] sm:$0xff]
      %v1803 = vld [vmem:[%s1597 + $0x81] sm:$0xff]
      %v1804 = vld [vmem:[%s1597 + $0x91] sm:$0xff]
      %v1805 = vld [vmem:[%s1597 + $0x99] sm:$0xff]
      %v1806 = vld [vmem:[%s1597 + $0xa9] sm:$0xff]
      %v1807 = vld [vmem:[%s1597 + $0xb1] sm:$0xff]
      %s1808 = scalar_lea.vmem %s158, 896
      %v1809 = vld [vmem:[%s1808] sm:$0xff]
      %v1810 = vld [vmem:[%s1808 + $0x8] sm:$0xff]
      %v1811 = vld [vmem:[%s1808 + $0x10] sm:$0xff]
      %v1812 = vld [vmem:[%s1808 + $0x18] sm:$0xff]
      %v1813 = vld [vmem:[%s1808 + $0x20] sm:$0xff]
      %v1814 = vld [vmem:[%s1808 + $0x28] sm:$0xff]
      %v1815 = vld [vmem:[%s1808 + $0x30] sm:$0xff]
      %v1816 = vld [vmem:[%s1808 + $0x38] sm:$0xff]
      %v1817 = vld [vmem:[%s1808 + $0x40] sm:$0xff]
      %v1818 = vld [vmem:[%s1808 + $0x48] sm:$0xff]
      %v1819 = vld [vmem:[%s1808 + $0x50] sm:$0xff]
      %v1820 = vld [vmem:[%s1808 + $0x58] sm:$0xff]
      %v1821 = vld [vmem:[%s1808 + $0x60] sm:$0xff]
      %v1822 = vld [vmem:[%s1808 + $0x68] sm:$0xff]
      %v1823 = vld [vmem:[%s1808 + $0x70] sm:$0xff]
      %v1824 = vld [vmem:[%s1808 + $0x78] sm:$0xff]
      %1825 = vmatprep.subr.mxu0 0.0
      %1826 = vmatpush1.msra.mxu0 %v1809
      %1827 = vmatprep.subr.mxu0 0.0
      %1828 = vmatpush1.msra.mxu0 %v1810
      %1829 = vmatprep.subr.mxu0 0.0
      %1830 = vmatpush1.msra.mxu0 %v1811
      %1831 = vmatprep.subr.mxu0 0.0
      %1832 = vmatpush1.msra.mxu0 %v1812
      %1833 = vmatprep.subr.mxu0 0.0
      %1834 = vmatpush1.msra.mxu0 %v1813
      %1835 = vmatprep.subr.mxu0 0.0
      %1836 = vmatpush1.msra.mxu0 %v1814
      %1837 = vmatprep.subr.mxu0 0.0
      %1838 = vmatpush1.msra.mxu0 %v1815
      %1839 = vmatprep.subr.mxu0 0.0
      %1840 = vmatpush1.msra.mxu0 %v1816
      %1841 = vmatprep.subr.mxu0 0.0
      %1842 = vmatpush1.msra.mxu0 %v1817
      %1843 = vmatprep.subr.mxu0 0.0
      %1844 = vmatpush1.msra.mxu0 %v1818
      %1845 = vmatprep.subr.mxu0 0.0
      %1846 = vmatpush1.msra.mxu0 %v1819
      %1847 = vmatprep.subr.mxu0 0.0
      %1848 = vmatpush1.msra.mxu0 %v1820
      %1849 = vmatprep.subr.mxu0 0.0
      %1850 = vmatpush1.msra.mxu0 %v1821
      %1851 = vmatprep.subr.mxu0 0.0
      %1852 = vmatpush1.msra.mxu0 %v1822
      %1853 = vmatprep.subr.mxu0 0.0
      %1854 = vmatpush1.msra.mxu0 %v1823
      %1855 = vmatprep.subr.mxu0 0.0
      %1856 = vmatpush1.msra.mxu0 %v1824
      %1857 = vmatprep.subr.mxu0 0.0
      %1858 = vmatpush1.msra.mxu0 0.0
      %1859 = vmatprep.subr.mxu0 0.0
      %1860 = vmatpush1.msra.mxu0 0.0
      %1861 = vmatprep.subr.mxu0 0.0
      %1862 = vmatpush1.msra.mxu0 0.0
      %1863 = vmatprep.subr.mxu0 0.0
      %1864 = vmatpush1.msra.mxu0 0.0
      %1865 = vmatprep.subr.mxu0 0.0
      %1866 = vmatpush1.msra.mxu0 0.0
      %1867 = vmatprep.subr.mxu0 0.0
      %1868 = vmatpush1.msra.mxu0 0.0
      %1869 = vmatprep.subr.mxu0 0.0
      %1870 = vmatpush1.msra.mxu0 0.0
      %1871 = vmatprep.subr.mxu0 0.0
      %1872 = vmatpush1.msra.mxu0 0.0
      %1873 = vmatprep.subr.mxu0 0.0
      %1874 = vmatpush1.msra.mxu0 0.0
      %1875 = vmatprep.subr.mxu0 0.0
      %1876 = vmatpush1.msra.mxu0 0.0
      %1877 = vmatprep.subr.mxu0 0.0
      %1878 = vmatpush1.msra.mxu0 0.0
      %1879 = vmatprep.subr.mxu0 0.0
      %1880 = vmatpush1.msra.mxu0 0.0
      %1881 = vmatprep.subr.mxu0 0.0
      %1882 = vmatpush1.msra.mxu0 0.0
      %1883 = vmatprep.subr.mxu0 0.0
      %1884 = vmatpush1.msra.mxu0 0.0
      %1885 = vmatprep.subr.mxu0 0.0
      %1886 = vmatpush1.msra.mxu0 0.0
      %1887 = vmatprep.subr.mxu0 0.0
      %1888 = vmatpush1.msra.mxu0 0.0
      %1889 = vmatprep.mubr.f32.mxu0 0.0
      %1890 = vmatmul.mubr.f32.gmra.mrb[0].mxu0 %v1792
      %v1891 = vpop.f32.mrb[0].mxu0
      %v1892 = vadd.f32 0.0, %v1891
      %v1893 = vpop.f32.mrb[0].mxu0
      %1894 = vmatprep.mubr.f32.mxu0 0.0
      %1895 = vmatmul.mubr.f32.gmra.mrb[0].mxu0 %v1793
      %v1896 = vpop.f32.mrb[0].mxu0
      %v1897 = vadd.f32 0.0, %v1896
      %v1898 = vpop.f32.mrb[0].mxu0
      %1899 = vmatprep.mubr.f32.mxu0 0.0
      %1900 = vmatmul.mubr.f32.gmra.mrb[0].mxu0 %v1794
      %v1901 = vpop.f32.mrb[0].mxu0
      %v1902 = vadd.f32 0.0, %v1901
      %v1903 = vpop.f32.mrb[0].mxu0
      %1904 = vmatprep.mubr.f32.mxu0 0.0
      %1905 = vmatmul.mubr.f32.gmra.mrb[0].mxu0 %v1795
      %v1906 = vpop.f32.mrb[0].mxu0
      %v1907 = vadd.f32 0.0, %v1906
      %v1908 = vpop.f32.mrb[0].mxu0
      %1909 = vmatprep.mubr.f32.mxu0 0.0
      %1910 = vmatmul.mubr.f32.gmra.mrb[0].mxu0 %v1796
      %v1911 = vpop.f32.mrb[0].mxu0
      %v1912 = vadd.f32 0.0, %v1911
      %v1913 = vpop.f32.mrb[0].mxu0
      %1914 = vmatprep.mubr.f32.mxu0 0.0
      %1915 = vmatmul.mubr.f32.gmra.mrb[0].mxu0 %v1797
      %v1916 = vpop.f32.mrb[0].mxu0
      %v1917 = vadd.f32 0.0, %v1916
      %v1918 = vpop.f32.mrb[0].mxu0
      %1919 = vmatprep.mubr.f32.mxu0 0.0
      %1920 = vmatmul.mubr.f32.gmra.mrb[0].mxu0 %v1798
      %v1921 = vpop.f32.mrb[0].mxu0
      %v1922 = vadd.f32 0.0, %v1921
      %v1923 = vpop.f32.mrb[0].mxu0
      %1924 = vmatprep.mubr.f32.mxu0 0.0
      %1925 = vmatmul.mubr.f32.gmra.mrb[0].mxu0 %v1799
      %v1926 = vpop.f32.mrb[0].mxu0
      %v1927 = vadd.f32 0.0, %v1926
      %v1928 = vpop.f32.mrb[0].mxu0
      %1929 = vmatprep.mubr.f32.mxu0 0.0
      %1930 = vmatmul.mubr.f32.gmra.mrb[0].mxu0 %v1800
      %v1931 = vpop.f32.mrb[0].mxu0
      %v1932 = vadd.f32 0.0, %v1931
      %v1933 = vpop.f32.mrb[0].mxu0
      %1934 = vmatprep.mubr.f32.mxu0 0.0
      %1935 = vmatmul.mubr.f32.gmra.mrb[0].mxu0 %v1801
      %v1936 = vpop.f32.mrb[0].mxu0
      %v1937 = vadd.f32 0.0, %v1936
      %v1938 = vpop.f32.mrb[0].mxu0
      %1939 = vmatprep.mubr.f32.mxu0 0.0
      %1940 = vmatmul.mubr.f32.gmra.mrb[0].mxu0 %v1802
      %v1941 = vpop.f32.mrb[0].mxu0
      %v1942 = vadd.f32 0.0, %v1941
      %v1943 = vpop.f32.mrb[0].mxu0
      %1944 = vmatprep.mubr.f32.mxu0 0.0
      %1945 = vmatmul.mubr.f32.gmra.mrb[0].mxu0 %v1803
      %v1946 = vpop.f32.mrb[0].mxu0
      %v1947 = vadd.f32 0.0, %v1946
      %v1948 = vpop.f32.mrb[0].mxu0
      %1949 = vmatprep.mubr.f32.mxu0 0.0
      %1950 = vmatmul.mubr.f32.gmra.mrb[0].mxu0 %v1804
      %v1951 = vpop.f32.mrb[0].mxu0
      %v1952 = vadd.f32 0.0, %v1951
      %v1953 = vpop.f32.mrb[0].mxu0
      %1954 = vmatprep.mubr.f32.mxu0 0.0
      %1955 = vmatmul.mubr.f32.gmra.mrb[0].mxu0 %v1805
      %v1956 = vpop.f32.mrb[0].mxu0
      %v1957 = vadd.f32 0.0, %v1956
      %v1958 = vpop.f32.mrb[0].mxu0
      %1959 = vmatprep.mubr.f32.mxu0 0.0
      %1960 = vmatmul.mubr.f32.gmra.mrb[0].mxu0 %v1806
      %v1961 = vpop.f32.mrb[0].mxu0
      %v1962 = vadd.f32 0.0, %v1961
      %v1963 = vpop.f32.mrb[0].mxu0
      %1964 = vmatprep.mubr.f32.mxu0 0.0
      %1965 = vmatmul.mubr.f32.gmra.mrb[0].mxu0 %v1807
      %v1966 = vpop.f32.mrb[0].mxu0
      %v1967 = vadd.f32 0.0, %v1966
      %v1968 = vpop.f32.mrb[0].mxu0
      %1969 = vdwg.mxu0
      %v1970 = vadd.f32 %v1776, %v1892
      %v1971 = vadd.f32 %v1777, %v1897
      %v1972 = vadd.f32 %v1778, %v1902
      %v1973 = vadd.f32 %v1779, %v1907
      %v1974 = vadd.f32 %v1780, %v1912
      %v1975 = vadd.f32 %v1781, %v1917
      %v1976 = vadd.f32 %v1782, %v1922
      %v1977 = vadd.f32 %v1783, %v1927
      %v1978 = vadd.f32 %v1784, %v1932
      %v1979 = vadd.f32 %v1785, %v1937
      %v1980 = vadd.f32 %v1786, %v1942
      %v1981 = vadd.f32 %v1787, %v1947
      %v1982 = vadd.f32 %v1788, %v1952
      %v1983 = vadd.f32 %v1789, %v1957
      %v1984 = vadd.f32 %v1790, %v1962
      %v1985 = vadd.f32 %v1791, %v1967
      %v1986 = vld [vmem:[%s1597 + $0x2] sm:$0xff]
      %v1987 = vld [vmem:[%s1597 + $0xa] sm:$0xff]
      %v1988 = vld [vmem:[%s1597 + $0x1a] sm:$0xff]
      %v1989 = vld [vmem:[%s1597 + $0x22] sm:$0xff]
      %v1990 = vld [vmem:[%s1597 + $0x32] sm:$0xff]
      %v1991 = vld [vmem:[%s1597 + $0x3a] sm:$0xff]
      %v1992 = vld [vmem:[%s1597 + $0x4a] sm:$0xff]
      %v1993 = vld [vmem:[%s1597 + $0x52] sm:$0xff]
      %v1994 = vld [vmem:[%s1597 + $0x62] sm:$0xff]
      %v1995 = vld [vmem:[%s1597 + $0x6a] sm:$0xff]
      %v1996 = vld [vmem:[%s1597 + $0x7a] sm:$0xff]
      %v1997 = vld [vmem:[%s1597 + $0x82] sm:$0xff]
      %v1998 = vld [vmem:[%s1597 + $0x92] sm:$0xff]
      %v1999 = vld [vmem:[%s1597 + $0x9a] sm:$0xff]
      %v2000 = vld [vmem:[%s1597 + $0xaa] sm:$0xff]
      %v2001 = vld [vmem:[%s1597 + $0xb2] sm:$0xff]
      %s2002 = scalar_lea.vmem %s158, 1024
      %v2003 = vld [vmem:[%s2002] sm:$0xff]
      %v2004 = vld [vmem:[%s2002 + $0x8] sm:$0xff]
      %v2005 = vld [vmem:[%s2002 + $0x10] sm:$0xff]
      %v2006 = vld [vmem:[%s2002 + $0x18] sm:$0xff]
      %v2007 = vld [vmem:[%s2002 + $0x20] sm:$0xff]
      %v2008 = vld [vmem:[%s2002 + $0x28] sm:$0xff]
      %v2009 = vld [vmem:[%s2002 + $0x30] sm:$0xff]
      %v2010 = vld [vmem:[%s2002 + $0x38] sm:$0xff]
      %v2011 = vld [vmem:[%s2002 + $0x40] sm:$0xff]
      %v2012 = vld [vmem:[%s2002 + $0x48] sm:$0xff]
      %v2013 = vld [vmem:[%s2002 + $0x50] sm:$0xff]
      %v2014 = vld [vmem:[%s2002 + $0x58] sm:$0xff]
      %v2015 = vld [vmem:[%s2002 + $0x60] sm:$0xff]
      %v2016 = vld [vmem:[%s2002 + $0x68] sm:$0xff]
      %v2017 = vld [vmem:[%s2002 + $0x70] sm:$0xff]
      %v2018 = vld [vmem:[%s2002 + $0x78] sm:$0xff]
      %2019 = vmatprep.subr.mxu0 0.0
      %2020 = vmatpush1.msra.mxu0 %v2003
      %2021 = vmatprep.subr.mxu0 0.0
      %2022 = vmatpush1.msra.mxu0 %v2004
      %2023 = vmatprep.subr.mxu0 0.0
      %2024 = vmatpush1.msra.mxu0 %v2005
      %2025 = vmatprep.subr.mxu0 0.0
      %2026 = vmatpush1.msra.mxu0 %v2006
      %2027 = vmatprep.subr.mxu0 0.0
      %2028 = vmatpush1.msra.mxu0 %v2007
      %2029 = vmatprep.subr.mxu0 0.0
      %2030 = vmatpush1.msra.mxu0 %v2008
      %2031 = vmatprep.subr.mxu0 0.0
      %2032 = vmatpush1.msra.mxu0 %v2009
      %2033 = vmatprep.subr.mxu0 0.0
      %2034 = vmatpush1.msra.mxu0 %v2010
      %2035 = vmatprep.subr.mxu0 0.0
      %2036 = vmatpush1.msra.mxu0 %v2011
      %2037 = vmatprep.subr.mxu0 0.0
      %2038 = vmatpush1.msra.mxu0 %v2012
      %2039 = vmatprep.subr.mxu0 0.0
      %2040 = vmatpush1.msra.mxu0 %v2013
      %2041 = vmatprep.subr.mxu0 0.0
      %2042 = vmatpush1.msra.mxu0 %v2014
      %2043 = vmatprep.subr.mxu0 0.0
      %2044 = vmatpush1.msra.mxu0 %v2015
      %2045 = vmatprep.subr.mxu0 0.0
      %2046 = vmatpush1.msra.mxu0 %v2016
      %2047 = vmatprep.subr.mxu0 0.0
      %2048 = vmatpush1.msra.mxu0 %v2017
      %2049 = vmatprep.subr.mxu0 0.0
      %2050 = vmatpush1.msra.mxu0 %v2018
      %2051 = vmatprep.subr.mxu0 0.0
      %2052 = vmatpush1.msra.mxu0 0.0
      %2053 = vmatprep.subr.mxu0 0.0
      %2054 = vmatpush1.msra.mxu0 0.0
      %2055 = vmatprep.subr.mxu0 0.0
      %2056 = vmatpush1.msra.mxu0 0.0
      %2057 = vmatprep.subr.mxu0 0.0
      %2058 = vmatpush1.msra.mxu0 0.0
      %2059 = vmatprep.subr.mxu0 0.0
      %2060 = vmatpush1.msra.mxu0 0.0
      %2061 = vmatprep.subr.mxu0 0.0
      %2062 = vmatpush1.msra.mxu0 0.0
      %2063 = vmatprep.subr.mxu0 0.0
      %2064 = vmatpush1.msra.mxu0 0.0
      %2065 = vmatprep.subr.mxu0 0.0
      %2066 = vmatpush1.msra.mxu0 0.0
      %2067 = vmatprep.subr.mxu0 0.0
      %2068 = vmatpush1.msra.mxu0 0.0
      %2069 = vmatprep.subr.mxu0 0.0
      %2070 = vmatpush1.msra.mxu0 0.0
      %2071 = vmatprep.subr.mxu0 0.0
      %2072 = vmatpush1.msra.mxu0 0.0
      %2073 = vmatprep.subr.mxu0 0.0
      %2074 = vmatpush1.msra.mxu0 0.0
      %2075 = vmatprep.subr.mxu0 0.0
      %2076 = vmatpush1.msra.mxu0 0.0
      %2077 = vmatprep.subr.mxu0 0.0
      %2078 = vmatpush1.msra.mxu0 0.0
      %2079 = vmatprep.subr.mxu0 0.0
      %2080 = vmatpush1.msra.mxu0 0.0
      %2081 = vmatprep.subr.mxu0 0.0
      %2082 = vmatpush1.msra.mxu0 0.0
      %2083 = vmatprep.mubr.f32.mxu0 0.0
      %2084 = vmatmul.mubr.f32.gmra.mrb[0].mxu0 %v1986
      %v2085 = vpop.f32.mrb[0].mxu0
      %v2086 = vadd.f32 0.0, %v2085
      %v2087 = vpop.f32.mrb[0].mxu0
      %2088 = vmatprep.mubr.f32.mxu0 0.0
      %2089 = vmatmul.mubr.f32.gmra.mrb[0].mxu0 %v1987
      %v2090 = vpop.f32.mrb[0].mxu0
      %v2091 = vadd.f32 0.0, %v2090
      %v2092 = vpop.f32.mrb[0].mxu0
      %2093 = vmatprep.mubr.f32.mxu0 0.0
      %2094 = vmatmul.mubr.f32.gmra.mrb[0].mxu0 %v1988
      %v2095 = vpop.f32.mrb[0].mxu0
      %v2096 = vadd.f32 0.0, %v2095
      %v2097 = vpop.f32.mrb[0].mxu0
      %2098 = vmatprep.mubr.f32.mxu0 0.0
      %2099 = vmatmul.mubr.f32.gmra.mrb[0].mxu0 %v1989
      %v2100 = vpop.f32.mrb[0].mxu0
      %v2101 = vadd.f32 0.0, %v2100
      %v2102 = vpop.f32.mrb[0].mxu0
      %2103 = vmatprep.mubr.f32.mxu0 0.0
      %2104 = vmatmul.mubr.f32.gmra.mrb[0].mxu0 %v1990
      %v2105 = vpop.f32.mrb[0].mxu0
      %v2106 = vadd.f32 0.0, %v2105
      %v2107 = vpop.f32.mrb[0].mxu0
      %2108 = vmatprep.mubr.f32.mxu0 0.0
      %2109 = vmatmul.mubr.f32.gmra.mrb[0].mxu0 %v1991
      %v2110 = vpop.f32.mrb[0].mxu0
      %v2111 = vadd.f32 0.0, %v2110
      %v2112 = vpop.f32.mrb[0].mxu0
      %2113 = vmatprep.mubr.f32.mxu0 0.0
      %2114 = vmatmul.mubr.f32.gmra.mrb[0].mxu0 %v1992
      %v2115 = vpop.f32.mrb[0].mxu0
      %v2116 = vadd.f32 0.0, %v2115
      %v2117 = vpop.f32.mrb[0].mxu0
      %2118 = vmatprep.mubr.f32.mxu0 0.0
      %2119 = vmatmul.mubr.f32.gmra.mrb[0].mxu0 %v1993
      %v2120 = vpop.f32.mrb[0].mxu0
      %v2121 = vadd.f32 0.0, %v2120
      %v2122 = vpop.f32.mrb[0].mxu0
      %2123 = vmatprep.mubr.f32.mxu0 0.0
      %2124 = vmatmul.mubr.f32.gmra.mrb[0].mxu0 %v1994
      %v2125 = vpop.f32.mrb[0].mxu0
      %v2126 = vadd.f32 0.0, %v2125
      %v2127 = vpop.f32.mrb[0].mxu0
      %2128 = vmatprep.mubr.f32.mxu0 0.0
      %2129 = vmatmul.mubr.f32.gmra.mrb[0].mxu0 %v1995
      %v2130 = vpop.f32.mrb[0].mxu0
      %v2131 = vadd.f32 0.0, %v2130
      %v2132 = vpop.f32.mrb[0].mxu0
      %2133 = vmatprep.mubr.f32.mxu0 0.0
      %2134 = vmatmul.mubr.f32.gmra.mrb[0].mxu0 %v1996
      %v2135 = vpop.f32.mrb[0].mxu0
      %v2136 = vadd.f32 0.0, %v2135
      %v2137 = vpop.f32.mrb[0].mxu0
      %2138 = vmatprep.mubr.f32.mxu0 0.0
      %2139 = vmatmul.mubr.f32.gmra.mrb[0].mxu0 %v1997
      %v2140 = vpop.f32.mrb[0].mxu0
      %v2141 = vadd.f32 0.0, %v2140
      %v2142 = vpop.f32.mrb[0].mxu0
      %2143 = vmatprep.mubr.f32.mxu0 0.0
      %2144 = vmatmul.mubr.f32.gmra.mrb[0].mxu0 %v1998
      %v2145 = vpop.f32.mrb[0].mxu0
      %v2146 = vadd.f32 0.0, %v2145
      %v2147 = vpop.f32.mrb[0].mxu0
      %2148 = vmatprep.mubr.f32.mxu0 0.0
      %2149 = vmatmul.mubr.f32.gmra.mrb[0].mxu0 %v1999
      %v2150 = vpop.f32.mrb[0].mxu0
      %v2151 = vadd.f32 0.0, %v2150
      %v2152 = vpop.f32.mrb[0].mxu0
      %2153 = vmatprep.mubr.f32.mxu0 0.0
      %2154 = vmatmul.mubr.f32.gmra.mrb[0].mxu0 %v2000
      %v2155 = vpop.f32.mrb[0].mxu0
      %v2156 = vadd.f32 0.0, %v2155
      %v2157 = vpop.f32.mrb[0].mxu0
      %2158 = vmatprep.mubr.f32.mxu0 0.0
      %2159 = vmatmul.mubr.f32.gmra.mrb[0].mxu0 %v2001
      %v2160 = vpop.f32.mrb[0].mxu0
      %v2161 = vadd.f32 0.0, %v2160
      %v2162 = vpop.f32.mrb[0].mxu0
      %2163 = vdwg.mxu0
      %v2164 = vadd.f32 %v1970, %v2086
      %v2165 = vadd.f32 %v1971, %v2091
      %v2166 = vadd.f32 %v1972, %v2096
      %v2167 = vadd.f32 %v1973, %v2101
      %v2168 = vadd.f32 %v1974, %v2106
      %v2169 = vadd.f32 %v1975, %v2111
      %v2170 = vadd.f32 %v1976, %v2116
      %v2171 = vadd.f32 %v1977, %v2121
      %v2172 = vadd.f32 %v1978, %v2126
      %v2173 = vadd.f32 %v1979, %v2131
      %v2174 = vadd.f32 %v1980, %v2136
      %v2175 = vadd.f32 %v1981, %v2141
      %v2176 = vadd.f32 %v1982, %v2146
      %v2177 = vadd.f32 %v1983, %v2151
      %v2178 = vadd.f32 %v1984, %v2156
      %v2179 = vadd.f32 %v1985, %v2161
      %v2180 = vld [vmem:[%s2] sm:$0x1]
      %v2182 = vlaneseq
      %v2183 = vshrl.u32 %v2182, 7
      %v2184 = vsub.s32 0, %v2183
      %v2185 = vrot.slane %v2180, %v2184
      %v2187 = vadd.f32 %v2164, %v2185
      %v2188 = vadd.f32 %v2165, %v2185
      %v2189 = vadd.f32 %v2166, %v2185
      %v2190 = vadd.f32 %v2167, %v2185
      %v2191 = vadd.f32 %v2168, %v2185
      %v2192 = vadd.f32 %v2169, %v2185
      %v2193 = vadd.f32 %v2170, %v2185
      %v2194 = vadd.f32 %v2171, %v2185
      %v2195 = vadd.f32 %v2172, %v2185
      %v2196 = vadd.f32 %v2173, %v2185
      %v2197 = vadd.f32 %v2174, %v2185
      %v2198 = vadd.f32 %v2175, %v2185
      %v2199 = vadd.f32 %v2176, %v2185
      %v2200 = vadd.f32 %v2177, %v2185
      %v2201 = vadd.f32 %v2178, %v2185
      %v2202 = vadd.f32 %v2179, %v2185
      %2203 = vst [vmem:[%s168] sm:$0xff] %v2187
      %2204 = vst [vmem:[%s168 + $0x8] sm:$0xff] %v2188
      %2205 = vst [vmem:[%s168 + $0x10] sm:$0xff] %v2189
      %2206 = vst [vmem:[%s168 + $0x18] sm:$0xff] %v2190
      %2207 = vst [vmem:[%s168 + $0x20] sm:$0xff] %v2191
      %2208 = vst [vmem:[%s168 + $0x28] sm:$0xff] %v2192
      %2209 = vst [vmem:[%s168 + $0x30] sm:$0xff] %v2193
      %2210 = vst [vmem:[%s168 + $0x38] sm:$0xff] %v2194
      %2211 = vst [vmem:[%s168 + $0x40] sm:$0xff] %v2195
      %2212 = vst [vmem:[%s168 + $0x48] sm:$0xff] %v2196
      %2213 = vst [vmem:[%s168 + $0x50] sm:$0xff] %v2197
      %2214 = vst [vmem:[%s168 + $0x58] sm:$0xff] %v2198
      %2215 = vst [vmem:[%s168 + $0x60] sm:$0xff] %v2199
      %2216 = vst [vmem:[%s168 + $0x68] sm:$0xff] %v2200
      %2217 = vst [vmem:[%s168 + $0x70] sm:$0xff] %v2201
      %2218 = vst [vmem:[%s168 + $0x78] sm:$0xff] %v2202
      %s2219 = smul.u32 8, %s19
      %p2220 = scmp.lt.s32.totalorder %s18, 1
      %s2221 = scalar_select %p2220, %s18, 1
      %p2222 = scmp.lt.s32.totalorder %s2219, 15
      %s2223 = scalar_select %p2222, %s2219, 15
      %s2224 = smul.addr %s2223, 2
      %s2225 = smul.addr %s2221, 32
      %s2226 = sadd.s32 %s2224, %s2225
      %s2227 = smul.addr %s2226, 8
      %s2228 = scalar_lea.vmem %s3, %s2227
      // Predicated region
      $region111: #{kwds_conv2d.1} parent=27 // pred_check
        %p2229 = pneg %p93
      $region112: #{kwds_conv2d.1} parent=27 // pred_check_branch
        %2231 = sbr.rel (%p2229) target = $region114
      $region113: #{kwds_conv2d.1} parent=27 // pred_region
        %s2232 = smul.u32 8, %s19
      $region114: #{kwds_conv2d.1} parent=27 // pred_fallthru
        _
    $region28: #{kwds_conv2d.1} parent=5 // pred_fallthru
      _
    %p2233 = scmp.le.s32.totalorder 2, %s9
    // Predicated region
    $region115: #{kwds_conv2d.1} parent=5 // pred_check
      %p2234 = pneg %p2233
    $region116: #{kwds_conv2d.1} parent=5 // pred_check_branch
      %2236 = sbr.rel (%p2234) target = $region118
    $region117: #{kwds_conv2d.1} parent=5 // pred_region
      %s2237 = ssub.s32 %s9, 2
      // Predicated region
      $region119: #{kwds_conv2d.1} parent=117 // pred_check
        %p2238 = pneg %p99
      $region120: #{kwds_conv2d.1} parent=117 // pred_check_branch
        %2240 = sbr.rel (%p2238) target = $region122
      $region121: #{kwds_conv2d.1} parent=117 // pred_region
        %s2241 = smul.u32 8, %s21
        %p2242 = scmp.lt.s32.totalorder %s20, 1
        %s2243 = scalar_select %p2242, %s20, 1
        %p2244 = scmp.lt.s32.totalorder %s2241, 15
        %s2245 = scalar_select %p2244, %s2241, 15
        %s2246 = smul.addr %s2245, 2
        %s2247 = smul.addr %s2243, 32
        %s2248 = sadd.s32 %s2246, %s2247
        %s2249 = smul.addr %s2248, 8
        %s2250 = scalar_lea.vmem %s3, %s2249
      $region122: #{kwds_conv2d.1} parent=117 // pred_fallthru
        _
    $region118: #{kwds_conv2d.1} parent=5 // pred_fallthru
      _
  $region6: #{kwds_conv2d.1} parent=0 // loop_footer
    %s13 = sadd.s32 1, %s9
  $region7: #{kwds_conv2d.1} parent=0 // loop_footer_branch
    %8 = sbr.rel target = $region3
  $region8: #{kwds_conv2d.1} parent=0 // loop_exit
    _
  %2251 = vsyncmov [#allocation3]
  %s2252 = vpop.sfrf %2251
  %p2253 = scmp.eq.s32.totalorder %s2252, 0
  %p2254 = pneg %p2253
  %2256 = shalt.err (%p2254)
  %s2257 = scalar_lea.sflag [#allocation3], 1
  %2258 = vsyncmov %s2257
  %s2259 = vpop.sfrf %2258
  %p2260 = scmp.eq.s32.totalorder %s2259, 0
  %p2261 = pneg %p2260
  %2263 = shalt.err (%p2261)

</llo_original>
